<compile_context>
chip_gen: v7x
topology: tpu7x:2x2x1
jax: 0.10.0
libtpu: 0.0.40
codegen_flags: <defaults>
</compile_context>

<pallas_src>
import functools

import jax
import jax.numpy as jnp
from jax.experimental import pallas as pl
from jax.experimental.pallas import tpu as pltpu

HIDDEN = 100           # hidden_size in the PyTorch script
HIDDEN_PAD = 128       # lane-aligned hidden width (zero-padded)
OUT_ROWS = 8           # sublane-aligned output rows (row 0 = the real logit)
SIZE = 2               # stand-in for args.size
D_IN = SIZE * 256      # 512
BATCH = 256            # small, but >1 batch tile on v7x so the grid is exercised
MAX_TILE_B = 1024      # per-tile VMEM stays ~few MiB, far under every chip's limit


def _mlp_kernel(x_ref, w1_ref, b1_ref, w2_ref, b2_ref,
                w3_ref, b3_ref, w4t_ref, b4t_ref, o_ref):
    # One batch tile per grid step.  All matmuls: bf16 operands, f32 MXU
    # accumulation; activations/bias math in f32 (VPU/EUP).  Weights/biases
    # are grid-resident in VMEM; only x / out tiles stream per step.
    x = x_ref[...]                                                 # (tile_b, D_IN) bf16

    h1 = jnp.dot(x, w1_ref[...], preferred_element_type=jnp.float32) + b1_ref[...]
    h1 = jnp.maximum(h1, 0.0).astype(jnp.bfloat16)                 # ReLU -> bf16 operand

    h2 = jnp.dot(h1, w2_ref[...], preferred_element_type=jnp.float32) + b2_ref[...]
    h2 = jnp.tanh(h2).astype(jnp.bfloat16)                         # Tanh (f32 EUP) -> bf16

    h3 = jnp.dot(h2, w3_ref[...], preferred_element_type=jnp.float32) + b3_ref[...]
    h3 = jnp.maximum(h3, 0.0).astype(jnp.bfloat16)                 # ReLU -> bf16

    # Final layer computed transposed: contract the hidden dim of both
    # operands so the result is already a lane-dense (OUT_ROWS, tile_b) slab.
    logits_t = jax.lax.dot_general(
        w4t_ref[...], h3, (((1,), (1,)), ((), ())),
        preferred_element_type=jnp.float32)                        # (OUT_ROWS, tile_b)
    o_ref[...] = jax.nn.sigmoid(logits_t + b4t_ref[...])           # Sigmoid, 1 real vreg row


def _choose_tile_b(batch, max_tile=MAX_TILE_B):
    """Largest batch tile (multiple of 8, <= max_tile) dividing `batch`.

    On v7x (2 TensorCores sharing the 'parallel' grid axis) prefer an even
    tile count >= 2; on single-TC v5e/v6e one big tile avoids per-step
    pipeline overhead.  Falls back to a padded single/last tile if nothing
    divides the batch.
    """
    def best_divisor(require_even_tiles):
        best = None
        t = 8
        while t <= min(batch, max_tile):
            if batch % t == 0:
                n = batch // t
                if (not require_even_tiles) or (n >= 2 and n % 2 == 0):
                    best = t
            t += 8
        return best

    kind = jax.devices()[0].device_kind.lower()
    two_cores = ("v7" in kind) or ("7x" in kind)
    tile = (best_divisor(True) if two_cores else None) or best_divisor(False)
    if tile is None:   # ragged batch: pad (wrapper handles it)
        tile = min(max(8, -(-batch // 8) * 8), max_tile)
    return tile


@functools.partial(jax.jit, static_argnames=("tile_b",))
def net_forward(x, padded_params, *, tile_b):
    """x: (B, D_IN) float.  padded_params: lane-aligned bf16 weights / f32 biases."""
    w1, b1, w2, b2, w3, b3, w4t, b4t = padded_params
    batch = x.shape[0]

    x = x.astype(jnp.bfloat16)             # bf16 operand; halves the dominant HBM read

    pad_b = (-batch) % tile_b              # normally 0: tile_b is chosen to divide batch
    if pad_b:
        x = jnp.pad(x, ((0, pad_b), (0, 0)))
    bp = batch + pad_b
    grid = (bp // tile_b,)

    def resident(shape):
        # Weights/biases: one full-array block, same block every grid step
        # (Pallas skips the re-fetch when the block index does not change).
        return pl.BlockSpec(shape, lambda i: (0, 0))

    out_t = pl.pallas_call(
        _mlp_kernel,
        out_shape=jax.ShapeDtypeStruct((OUT_ROWS, bp), jnp.float32),
        grid=grid,
        in_specs=[
            pl.BlockSpec((tile_b, D_IN), lambda i: (i, 0)),          # x: batch-tiled, pipelined
            resident((D_IN, HIDDEN_PAD)),       resident((1, HIDDEN_PAD)),   # L1
            resident((HIDDEN_PAD, HIDDEN_PAD)), resident((1, HIDDEN_PAD)),   # L2
            resident((HIDDEN_PAD, HIDDEN_PAD)), resident((1, HIDDEN_PAD)),   # L3
            resident((OUT_ROWS, HIDDEN_PAD)),   resident((OUT_ROWS, 1)),     # L4 (transposed)
        ],
        out_specs=pl.BlockSpec((OUT_ROWS, tile_b), lambda i: (0, i)),
        compiler_params=pltpu.CompilerParams(
            dimension_semantics=("parallel",)),                      # shards batch tiles across TCs (v7x)
    )(x, w1, b1, w2, b2, w3, b3, w4t, b4t)

    # Row 0 holds the real logits; rows 1..7 and padded batch cols are discarded.
    return out_t[0, :batch].reshape(batch, 1)


def make_params(key):
    """PyTorch-Linear-style init at the *original* sizes (HIDDEN=100, out=1)."""
    def linear(key, fan_in, fan_out):
        k_w, k_b = jax.random.split(key)
        bound = 1.0 / (fan_in ** 0.5)
        w = jax.random.uniform(k_w, (fan_in, fan_out), jnp.float32, -bound, bound)
        b = jax.random.uniform(k_b, (1, fan_out), jnp.float32, -bound, bound)
        return w, b

    k1, k2, k3, k4 = jax.random.split(key, 4)
    w1, b1 = linear(k1, D_IN, HIDDEN)
    w2, b2 = linear(k2, HIDDEN, HIDDEN)
    w3, b3 = linear(k3, HIDDEN, HIDDEN)
    w4, b4 = linear(k4, HIDDEN, 1)
    return (w1, b1, w2, b2, w3, b3, w4, b4)


def pad_params(params):
    """Zero-pad hidden dims 100 -> 128, cast weights to bf16 (biases stay f32).

    Exact padding: padded input cols multiply activations that are identically
    zero (ReLU(0)/tanh(0)); padded output cols/rows have zero W and b.
    The final layer is stored transposed as (OUT_ROWS, HIDDEN_PAD) with row 0
    real, so the kernel contracts the hidden dim and writes a lane-dense slab.
    """
    w1, b1, w2, b2, w3, b3, w4, b4 = params

    def padw(w, rows, cols):
        return jnp.pad(w, ((0, rows - w.shape[0]),
                           (0, cols - w.shape[1]))).astype(jnp.bfloat16)

    def padb(b, cols):
        return jnp.pad(b, ((0, 0), (0, cols - b.shape[1])))          # f32

    w4t = jnp.pad(w4.T, ((0, OUT_ROWS - 1),
                         (0, HIDDEN_PAD - HIDDEN))).astype(jnp.bfloat16)   # (8, 128)
    b4t = jnp.pad(b4.T, ((0, OUT_ROWS - 1), (0, 0)))                       # (8, 1) f32

    return (padw(w1, D_IN, HIDDEN_PAD),       padb(b1, HIDDEN_PAD),
            padw(w2, HIDDEN_PAD, HIDDEN_PAD), padb(b2, HIDDEN_PAD),
            padw(w3, HIDDEN_PAD, HIDDEN_PAD), padb(b3, HIDDEN_PAD),
            w4t, b4t)


def reference_forward(x, params):
    """Pure-JAX f32 reference of the PyTorch forward pass (unpadded params)."""
    w1, b1, w2, b2, w3, b3, w4, b4 = params
    h = jnp.maximum(x @ w1 + b1, 0.0)
    h = jnp.tanh(h @ w2 + b2)
    h = jnp.maximum(h @ w3 + b3, 0.0)
    return jax.nn.sigmoid(h @ w4 + b4)


if __name__ == "__main__":
    key = jax.random.PRNGKey(0)
    k_x, k_p = jax.random.split(key)

    x = jax.random.normal(k_x, (BATCH, D_IN), jnp.float32)
    params = make_params(k_p)           # original PyTorch-shaped params (for reference)
    padded_params = pad_params(params)  # lane-aligned bf16 params consumed by the kernel

    tile_b = _choose_tile_b(BATCH)

    out = net_forward(x, padded_params, tile_b=tile_b)
    out = jax.block_until_ready(out)

    ref = reference_forward(x, params)
    assert out.shape == (BATCH, 1), out.shape
    # bf16 matmul operands (f32 accumulation) vs. an all-f32 reference.
    assert jnp.allclose(out, ref, atol=2e-2, rtol=2e-2), (
        f"max abs err = {jnp.max(jnp.abs(out - ref))}")

    print("KERNEL_OK")
</pallas_src>

<mosaic_0001>
module attributes {stable_mosaic.version = 11 : i64} {
  func.func @_mlp_kernel(%arg0: i32, %arg1: memref<256x512xbf16, #tpu.memory_space<vmem>>, %arg2: memref<512x128xbf16, #tpu.memory_space<vmem>>, %arg3: memref<1x128xf32, #tpu.memory_space<vmem>>, %arg4: memref<128x128xbf16, #tpu.memory_space<vmem>>, %arg5: memref<1x128xf32, #tpu.memory_space<vmem>>, %arg6: memref<128x128xbf16, #tpu.memory_space<vmem>>, %arg7: memref<1x128xf32, #tpu.memory_space<vmem>>, %arg8: memref<8x128xbf16, #tpu.memory_space<vmem>>, %arg9: memref<8x1xf32, #tpu.memory_space<vmem>>, %arg10: memref<8x256xf32, #tpu.memory_space<vmem>>) attributes {dimension_semantics = [#tpu.dimension_semantics<parallel>], iteration_bounds = array<i64: 1>, scalar_prefetch = 0 : i64, scratch_operands = 0 : i64, tpu.core_type = #tpu.core_type<tc>, window_params = [{transform_indices = @transform_0, window_bounds = array<i64: 256, 512>}, {pipeline_mode = #tpu.pipeline_mode<synchronous>, transform_indices = @transform_1, window_bounds = array<i64: 512, 128>}, {pipeline_mode = #tpu.pipeline_mode<synchronous>, transform_indices = @transform_2, window_bounds = array<i64: 1, 128>}, {pipeline_mode = #tpu.pipeline_mode<synchronous>, transform_indices = @transform_3, window_bounds = array<i64: 128, 128>}, {pipeline_mode = #tpu.pipeline_mode<synchronous>, transform_indices = @transform_4, window_bounds = array<i64: 1, 128>}, {pipeline_mode = #tpu.pipeline_mode<synchronous>, transform_indices = @transform_5, window_bounds = array<i64: 128, 128>}, {pipeline_mode = #tpu.pipeline_mode<synchronous>, transform_indices = @transform_6, window_bounds = array<i64: 1, 128>}, {pipeline_mode = #tpu.pipeline_mode<synchronous>, transform_indices = @transform_7, window_bounds = array<i64: 8, 128>}, {pipeline_mode = #tpu.pipeline_mode<synchronous>, transform_indices = @transform_8, window_bounds = array<i64: 8, 1>}, {transform_indices = @transform_9, window_bounds = array<i64: 8, 256>}]} {
    %c0 = arith.constant 0 : index
    %c0_0 = arith.constant 0 : index
    %0 = vector.load %arg1[%c0, %c0_0] : memref<256x512xbf16, #tpu.memory_space<vmem>>, vector<256x512xbf16>
    %c0_1 = arith.constant 0 : index
    %c0_2 = arith.constant 0 : index
    %1 = vector.load %arg2[%c0_1, %c0_2] : memref<512x128xbf16, #tpu.memory_space<vmem>>, vector<512x128xbf16>
    %cst = arith.constant dense<0.000000e+00> : vector<256x128xf32>
    %2 = tpu.matmul %0, %1, %cst {dimension_numbers = #tpu.dot_dimension_numbers<[1], [0], [0], [1], [0, 0, 1, 1], [], []>} : vector<256x512xbf16>, vector<512x128xbf16>, vector<256x128xf32> -> vector<256x128xf32>
    %c0_3 = arith.constant 0 : index
    %c0_4 = arith.constant 0 : index
    %3 = vector.load %arg3[%c0_3, %c0_4] : memref<1x128xf32, #tpu.memory_space<vmem>>, vector<1x128xf32>
    %4 = vector.broadcast %3 : vector<1x128xf32> to vector<256x128xf32>
    %5 = arith.addf %2, %4 : vector<256x128xf32>
    %cst_5 = arith.constant 0.000000e+00 : f32
    %6 = vector.broadcast %cst_5 : f32 to vector<256x128xf32>
    %7 = arith.maximumf %5, %6 : vector<256x128xf32>
    %8 = arith.truncf %7 : vector<256x128xf32> to vector<256x128xbf16>
    %c0_6 = arith.constant 0 : index
    %c0_7 = arith.constant 0 : index
    %9 = vector.load %arg4[%c0_6, %c0_7] : memref<128x128xbf16, #tpu.memory_space<vmem>>, vector<128x128xbf16>
    %cst_8 = arith.constant dense<0.000000e+00> : vector<256x128xf32>
    %10 = tpu.matmul %8, %9, %cst_8 {dimension_numbers = #tpu.dot_dimension_numbers<[1], [0], [0], [1], [0, 0, 1, 1], [], []>} : vector<256x128xbf16>, vector<128x128xbf16>, vector<256x128xf32> -> vector<256x128xf32>
    %c0_9 = arith.constant 0 : index
    %c0_10 = arith.constant 0 : index
    %11 = vector.load %arg5[%c0_9, %c0_10] : memref<1x128xf32, #tpu.memory_space<vmem>>, vector<1x128xf32>
    %12 = vector.broadcast %11 : vector<1x128xf32> to vector<256x128xf32>
    %13 = arith.addf %10, %12 : vector<256x128xf32>
    %14 = math.tanh %13 : vector<256x128xf32>
    %15 = arith.truncf %14 : vector<256x128xf32> to vector<256x128xbf16>
    %c0_11 = arith.constant 0 : index
    %c0_12 = arith.constant 0 : index
    %16 = vector.load %arg6[%c0_11, %c0_12] : memref<128x128xbf16, #tpu.memory_space<vmem>>, vector<128x128xbf16>
    %cst_13 = arith.constant dense<0.000000e+00> : vector<256x128xf32>
    %17 = tpu.matmul %15, %16, %cst_13 {dimension_numbers = #tpu.dot_dimension_numbers<[1], [0], [0], [1], [0, 0, 1, 1], [], []>} : vector<256x128xbf16>, vector<128x128xbf16>, vector<256x128xf32> -> vector<256x128xf32>
    %c0_14 = arith.constant 0 : index
    %c0_15 = arith.constant 0 : index
    %18 = vector.load %arg7[%c0_14, %c0_15] : memref<1x128xf32, #tpu.memory_space<vmem>>, vector<1x128xf32>
    %19 = vector.broadcast %18 : vector<1x128xf32> to vector<256x128xf32>
    %20 = arith.addf %17, %19 : vector<256x128xf32>
    %cst_16 = arith.constant 0.000000e+00 : f32
    %21 = vector.broadcast %cst_16 : f32 to vector<256x128xf32>
    %22 = arith.maximumf %20, %21 : vector<256x128xf32>
    %23 = arith.truncf %22 : vector<256x128xf32> to vector<256x128xbf16>
    %c0_17 = arith.constant 0 : index
    %c0_18 = arith.constant 0 : index
    %24 = vector.load %arg8[%c0_17, %c0_18] : memref<8x128xbf16, #tpu.memory_space<vmem>>, vector<8x128xbf16>
    %cst_19 = arith.constant dense<0.000000e+00> : vector<8x256xf32>
    %25 = tpu.matmul %24, %23, %cst_19 {dimension_numbers = #tpu.dot_dimension_numbers<[1], [1], [0], [0], [0, 0, 1, 0], [], []>} : vector<8x128xbf16>, vector<256x128xbf16>, vector<8x256xf32> -> vector<8x256xf32>
    %c0_20 = arith.constant 0 : index
    %c0_21 = arith.constant 0 : index
    %26 = vector.load %arg9[%c0_20, %c0_21] : memref<8x1xf32, #tpu.memory_space<vmem>>, vector<8x1xf32>
    %27 = vector.broadcast %26 : vector<8x1xf32> to vector<8x256xf32>
    %28 = arith.addf %25, %27 : vector<8x256xf32>
    %29 = arith.negf %28 : vector<8x256xf32>
    %30 = math.exp %29 : vector<8x256xf32>
    %cst_22 = arith.constant 1.000000e+00 : f32
    %31 = vector.broadcast %cst_22 : f32 to vector<8x256xf32>
    %32 = arith.addf %31, %30 : vector<8x256xf32>
    %33 = arith.divf %31, %32 : vector<8x256xf32>
    %c0_23 = arith.constant 0 : index
    %c0_24 = arith.constant 0 : index
    %34 = vector.load %arg10[%c0_23, %c0_24] : memref<8x256xf32, #tpu.memory_space<vmem>>, vector<8x256xf32>
    tpu.vector_store %arg10[%c0_23, %c0_24], %33 {strides = array<i32>} : memref<8x256xf32, #tpu.memory_space<vmem>>, vector<8x256xf32>,
    return
  }
  func.func @transform_0(%arg0: i32) -> (i32, i32) {
    %c0_i32 = arith.constant 0 : i32
    %c0_i32_0 = arith.constant 0 : i32
    return %arg0, %c0_i32 : i32, i32
  }
  func.func @transform_1(%arg0: i32) -> (i32, i32) {
    %c0_i32 = arith.constant 0 : i32
    %c0_i32_0 = arith.constant 0 : i32
    %c0_i32_1 = arith.constant 0 : i32
    return %c0_i32, %c0_i32_0 : i32, i32
  }
  func.func @transform_2(%arg0: i32) -> (i32, i32) {
    %c0_i32 = arith.constant 0 : i32
    %c0_i32_0 = arith.constant 0 : i32
    %c0_i32_1 = arith.constant 0 : i32
    return %c0_i32, %c0_i32_0 : i32, i32
  }
  func.func @transform_3(%arg0: i32) -> (i32, i32) {
    %c0_i32 = arith.constant 0 : i32
    %c0_i32_0 = arith.constant 0 : i32
    %c0_i32_1 = arith.constant 0 : i32
    return %c0_i32, %c0_i32_0 : i32, i32
  }
  func.func @transform_4(%arg0: i32) -> (i32, i32) {
    %c0_i32 = arith.constant 0 : i32
    %c0_i32_0 = arith.constant 0 : i32
    %c0_i32_1 = arith.constant 0 : i32
    return %c0_i32, %c0_i32_0 : i32, i32
  }
  func.func @transform_5(%arg0: i32) -> (i32, i32) {
    %c0_i32 = arith.constant 0 : i32
    %c0_i32_0 = arith.constant 0 : i32
    %c0_i32_1 = arith.constant 0 : i32
    return %c0_i32, %c0_i32_0 : i32, i32
  }
  func.func @transform_6(%arg0: i32) -> (i32, i32) {
    %c0_i32 = arith.constant 0 : i32
    %c0_i32_0 = arith.constant 0 : i32
    %c0_i32_1 = arith.constant 0 : i32
    return %c0_i32, %c0_i32_0 : i32, i32
  }
  func.func @transform_7(%arg0: i32) -> (i32, i32) {
    %c0_i32 = arith.constant 0 : i32
    %c0_i32_0 = arith.constant 0 : i32
    %c0_i32_1 = arith.constant 0 : i32
    return %c0_i32, %c0_i32_0 : i32, i32
  }
  func.func @transform_8(%arg0: i32) -> (i32, i32) {
    %c0_i32 = arith.constant 0 : i32
    %c0_i32_0 = arith.constant 0 : i32
    %c0_i32_1 = arith.constant 0 : i32
    return %c0_i32, %c0_i32_0 : i32, i32
  }
  func.func @transform_9(%arg0: i32) -> (i32, i32) {
    %c0_i32 = arith.constant 0 : i32
    %c0_i32_0 = arith.constant 0 : i32
    return %c0_i32, %arg0 : i32, i32
  }
}

</mosaic_0001>

<llo_original>
// kernel: net_forward.1
$region0: #{net_forward.1}
  #allocation0 [shape = 'u32[]', space=smem, size = 0x4, offset = 0x4, fixed_abs, tag = 'smem constant byte address 0x4 - core index']
  #allocation1 [shape = 'u32[144,128]{1,0:T(1,128)}', space=vmem, size = 0x12000, scoped, tag = 'internal scratch']
  %s0 = inlined_call_operand.vmem [shape: bf16[256,512], index: 0, kind: input, shape index: {}]
  %s1 = inlined_call_operand.vmem [shape: bf16[512,128], index: 1, kind: input, shape index: {}]
  %s2 = inlined_call_operand.vmem [shape: f32[1,128], index: 2, kind: input, shape index: {}]
  %s3 = inlined_call_operand.vmem [shape: bf16[128,128], index: 3, kind: input, shape index: {}]
  %s4 = inlined_call_operand.vmem [shape: f32[1,128], index: 4, kind: input, shape index: {}]
  %s5 = inlined_call_operand.vmem [shape: bf16[128,128], index: 5, kind: input, shape index: {}]
  %s6 = inlined_call_operand.vmem [shape: f32[1,128], index: 6, kind: input, shape index: {}]
  %s7 = inlined_call_operand.vmem [shape: bf16[8,128], index: 7, kind: input, shape index: {}]
  %s8 = inlined_call_operand.vmem [shape: f32[8,1], index: 8, kind: input, shape index: {}]
  %s9 = inlined_call_operand.vmem [shape: f32[8,256], index: 9, kind: output, shape index: {}]
  %s10 = sld [smem:[#allocation0]]
  $region46: #{net_forward.1} parent=0
    _
  %s12 = ssub.s32 1, %s10
  %s13 = scalar_select 0, %s12, %s10
  // Predicated region
  $region2: #{net_forward.1} parent=0 // pred_check
    _
  $region3: #{net_forward.1} parent=0 // pred_check_branch
    %15 = sbr.rel (0) target = $region5
  $region4: #{net_forward.1} parent=0 // pred_region
    _
  $region5: #{net_forward.1} parent=0 // pred_fallthru
    _
  // Predicated region
  $region6: #{net_forward.1} parent=0 // pred_check
    _
  $region7: #{net_forward.1} parent=0 // pred_check_branch
    %17 = sbr.rel (0) target = $region9
  $region8: #{net_forward.1} parent=0 // pred_region
    _
  $region9: #{net_forward.1} parent=0 // pred_fallthru
    _
  // Predicated region
  $region10: #{net_forward.1} parent=0 // pred_check
    _
  $region11: #{net_forward.1} parent=0 // pred_check_branch
    %19 = sbr.rel (0) target = $region13
  $region12: #{net_forward.1} parent=0 // pred_region
    _
  $region13: #{net_forward.1} parent=0 // pred_fallthru
    _
  // Predicated region
  $region14: #{net_forward.1} parent=0 // pred_check
    _
  $region15: #{net_forward.1} parent=0 // pred_check_branch
    %21 = sbr.rel (0) target = $region17
  $region16: #{net_forward.1} parent=0 // pred_region
    _
  $region17: #{net_forward.1} parent=0 // pred_fallthru
    _
  // Predicated region
  $region18: #{net_forward.1} parent=0 // pred_check
    _
  $region19: #{net_forward.1} parent=0 // pred_check_branch
    %23 = sbr.rel (0) target = $region21
  $region20: #{net_forward.1} parent=0 // pred_region
    _
  $region21: #{net_forward.1} parent=0 // pred_fallthru
    _
  // Predicated region
  $region22: #{net_forward.1} parent=0 // pred_check
    _
  $region23: #{net_forward.1} parent=0 // pred_check_branch
    %25 = sbr.rel (0) target = $region25
  $region24: #{net_forward.1} parent=0 // pred_region
    _
  $region25: #{net_forward.1} parent=0 // pred_fallthru
    _
  // Predicated region
  $region26: #{net_forward.1} parent=0 // pred_check
    _
  $region27: #{net_forward.1} parent=0 // pred_check_branch
    %27 = sbr.rel (0) target = $region29
  $region28: #{net_forward.1} parent=0 // pred_region
    _
  $region29: #{net_forward.1} parent=0 // pred_fallthru
    _
  // Predicated region
  $region30: #{net_forward.1} parent=0 // pred_check
    _
  $region31: #{net_forward.1} parent=0 // pred_check_branch
    %29 = sbr.rel (0) target = $region33
  $region32: #{net_forward.1} parent=0 // pred_region
    _
  $region33: #{net_forward.1} parent=0 // pred_fallthru
    _
  // Predicated region
  $region34: #{net_forward.1} parent=0 // pred_check
    _
  $region35: #{net_forward.1} parent=0 // pred_check_branch
    %31 = sbr.rel (0) target = $region37
  $region36: #{net_forward.1} parent=0 // pred_region
    _
  $region37: #{net_forward.1} parent=0 // pred_fallthru
    _
  %v33 = vld [vmem:[%s0] sm:$0xff]
  %v34 = vld [vmem:[%s0 + $0x8] sm:$0xff]
  %v35 = vld [vmem:[%s0 + $0x10] sm:$0xff]
  %v36 = vld [vmem:[%s0 + $0x18] sm:$0xff]
  %v37 = vld [vmem:[%s0 + $0x20] sm:$0xff]
  %v38 = vld [vmem:[%s0 + $0x28] sm:$0xff]
  %v39 = vld [vmem:[%s0 + $0x30] sm:$0xff]
  %v40 = vld [vmem:[%s0 + $0x38] sm:$0xff]
  %v41 = vld [vmem:[%s0 + $0x40] sm:$0xff]
  %v42 = vld [vmem:[%s0 + $0x48] sm:$0xff]
  %v43 = vld [vmem:[%s0 + $0x50] sm:$0xff]
  %v44 = vld [vmem:[%s0 + $0x58] sm:$0xff]
  %v45 = vld [vmem:[%s0 + $0x60] sm:$0xff]
  %v46 = vld [vmem:[%s0 + $0x68] sm:$0xff]
  %v47 = vld [vmem:[%s0 + $0x70] sm:$0xff]
  %v48 = vld [vmem:[%s0 + $0x78] sm:$0xff]
  %v49 = vld [vmem:[%s0 + $0x80] sm:$0xff]
  %v50 = vld [vmem:[%s0 + $0x88] sm:$0xff]
  %v51 = vld [vmem:[%s0 + $0x90] sm:$0xff]
  %v52 = vld [vmem:[%s0 + $0x98] sm:$0xff]
  %v53 = vld [vmem:[%s0 + $0xa0] sm:$0xff]
  %v54 = vld [vmem:[%s0 + $0xa8] sm:$0xff]
  %v55 = vld [vmem:[%s0 + $0xb0] sm:$0xff]
  %v56 = vld [vmem:[%s0 + $0xb8] sm:$0xff]
  %v57 = vld [vmem:[%s0 + $0xc0] sm:$0xff]
  %v58 = vld [vmem:[%s0 + $0xc8] sm:$0xff]
  %v59 = vld [vmem:[%s0 + $0xd0] sm:$0xff]
  %v60 = vld [vmem:[%s0 + $0xd8] sm:$0xff]
  %v61 = vld [vmem:[%s0 + $0xe0] sm:$0xff]
  %v62 = vld [vmem:[%s0 + $0xe8] sm:$0xff]
  %v63 = vld [vmem:[%s0 + $0xf0] sm:$0xff]
  %v64 = vld [vmem:[%s0 + $0xf8] sm:$0xff]
  %v65 = vld [vmem:[%s0 + $0x100] sm:$0xff]
  %v66 = vld [vmem:[%s0 + $0x108] sm:$0xff]
  %v67 = vld [vmem:[%s0 + $0x110] sm:$0xff]
  %v68 = vld [vmem:[%s0 + $0x118] sm:$0xff]
  %v69 = vld [vmem:[%s0 + $0x120] sm:$0xff]
  %v70 = vld [vmem:[%s0 + $0x128] sm:$0xff]
  %v71 = vld [vmem:[%s0 + $0x130] sm:$0xff]
  %v72 = vld [vmem:[%s0 + $0x138] sm:$0xff]
  %v73 = vld [vmem:[%s0 + $0x140] sm:$0xff]
  %v74 = vld [vmem:[%s0 + $0x148] sm:$0xff]
  %v75 = vld [vmem:[%s0 + $0x150] sm:$0xff]
  %v76 = vld [vmem:[%s0 + $0x158] sm:$0xff]
  %v77 = vld [vmem:[%s0 + $0x160] sm:$0xff]
  %v78 = vld [vmem:[%s0 + $0x168] sm:$0xff]
  %v79 = vld [vmem:[%s0 + $0x170] sm:$0xff]
  %v80 = vld [vmem:[%s0 + $0x178] sm:$0xff]
  %v81 = vld [vmem:[%s0 + $0x180] sm:$0xff]
  %v82 = vld [vmem:[%s0 + $0x188] sm:$0xff]
  %v83 = vld [vmem:[%s0 + $0x190] sm:$0xff]
  %v84 = vld [vmem:[%s0 + $0x198] sm:$0xff]
  %v85 = vld [vmem:[%s0 + $0x1a0] sm:$0xff]
  %v86 = vld [vmem:[%s0 + $0x1a8] sm:$0xff]
  %v87 = vld [vmem:[%s0 + $0x1b0] sm:$0xff]
  %v88 = vld [vmem:[%s0 + $0x1b8] sm:$0xff]
  %v89 = vld [vmem:[%s0 + $0x1c0] sm:$0xff]
  %v90 = vld [vmem:[%s0 + $0x1c8] sm:$0xff]
  %v91 = vld [vmem:[%s0 + $0x1d0] sm:$0xff]
  %v92 = vld [vmem:[%s0 + $0x1d8] sm:$0xff]
  %v93 = vld [vmem:[%s0 + $0x1e0] sm:$0xff]
  %v94 = vld [vmem:[%s0 + $0x1e8] sm:$0xff]
  %v95 = vld [vmem:[%s0 + $0x1f0] sm:$0xff]
  %v96 = vld [vmem:[%s0 + $0x1f8] sm:$0xff]
  %v97 = vld [vmem:[%s1] sm:$0xf]
  %v98 = vld [vmem:[%s1 + $0x4] sm:$0xf]
  %v99 = vld [vmem:[%s1 + $0x8] sm:$0xf]
  %v100 = vld [vmem:[%s1 + $0xc] sm:$0xf]
  %v101 = vld [vmem:[%s1 + $0x10] sm:$0xf]
  %v102 = vld [vmem:[%s1 + $0x14] sm:$0xf]
  %v103 = vld [vmem:[%s1 + $0x18] sm:$0xf]
  %v104 = vld [vmem:[%s1 + $0x1c] sm:$0xf]
  %v105 = vld [vmem:[%s1 + $0x20] sm:$0xf]
  %v106 = vld [vmem:[%s1 + $0x24] sm:$0xf]
  %v107 = vld [vmem:[%s1 + $0x28] sm:$0xf]
  %v108 = vld [vmem:[%s1 + $0x2c] sm:$0xf]
  %v109 = vld [vmem:[%s1 + $0x30] sm:$0xf]
  %v110 = vld [vmem:[%s1 + $0x34] sm:$0xf]
  %v111 = vld [vmem:[%s1 + $0x38] sm:$0xf]
  %v112 = vld [vmem:[%s1 + $0x3c] sm:$0xf]
  %v113 = vld [vmem:[%s1 + $0x40] sm:$0xf]
  %v114 = vld [vmem:[%s1 + $0x44] sm:$0xf]
  %v115 = vld [vmem:[%s1 + $0x48] sm:$0xf]
  %v116 = vld [vmem:[%s1 + $0x4c] sm:$0xf]
  %v117 = vld [vmem:[%s1 + $0x50] sm:$0xf]
  %v118 = vld [vmem:[%s1 + $0x54] sm:$0xf]
  %v119 = vld [vmem:[%s1 + $0x58] sm:$0xf]
  %v120 = vld [vmem:[%s1 + $0x5c] sm:$0xf]
  %v121 = vld [vmem:[%s1 + $0x60] sm:$0xf]
  %v122 = vld [vmem:[%s1 + $0x64] sm:$0xf]
  %v123 = vld [vmem:[%s1 + $0x68] sm:$0xf]
  %v124 = vld [vmem:[%s1 + $0x6c] sm:$0xf]
  %v125 = vld [vmem:[%s1 + $0x70] sm:$0xf]
  %v126 = vld [vmem:[%s1 + $0x74] sm:$0xf]
  %v127 = vld [vmem:[%s1 + $0x78] sm:$0xf]
  %v128 = vld [vmem:[%s1 + $0x7c] sm:$0xf]
  %v129 = vld [vmem:[%s1 + $0x80] sm:$0xf]
  %v130 = vld [vmem:[%s1 + $0x84] sm:$0xf]
  %v131 = vld [vmem:[%s1 + $0x88] sm:$0xf]
  %v132 = vld [vmem:[%s1 + $0x8c] sm:$0xf]
  %v133 = vld [vmem:[%s1 + $0x90] sm:$0xf]
  %v134 = vld [vmem:[%s1 + $0x94] sm:$0xf]
  %v135 = vld [vmem:[%s1 + $0x98] sm:$0xf]
  %v136 = vld [vmem:[%s1 + $0x9c] sm:$0xf]
  %v137 = vld [vmem:[%s1 + $0xa0] sm:$0xf]
  %v138 = vld [vmem:[%s1 + $0xa4] sm:$0xf]
  %v139 = vld [vmem:[%s1 + $0xa8] sm:$0xf]
  %v140 = vld [vmem:[%s1 + $0xac] sm:$0xf]
  %v141 = vld [vmem:[%s1 + $0xb0] sm:$0xf]
  %v142 = vld [vmem:[%s1 + $0xb4] sm:$0xf]
  %v143 = vld [vmem:[%s1 + $0xb8] sm:$0xf]
  %v144 = vld [vmem:[%s1 + $0xbc] sm:$0xf]
  %v145 = vld [vmem:[%s1 + $0xc0] sm:$0xf]
  %v146 = vld [vmem:[%s1 + $0xc4] sm:$0xf]
  %v147 = vld [vmem:[%s1 + $0xc8] sm:$0xf]
  %v148 = vld [vmem:[%s1 + $0xcc] sm:$0xf]
  %v149 = vld [vmem:[%s1 + $0xd0] sm:$0xf]
  %v150 = vld [vmem:[%s1 + $0xd4] sm:$0xf]
  %v151 = vld [vmem:[%s1 + $0xd8] sm:$0xf]
  %v152 = vld [vmem:[%s1 + $0xdc] sm:$0xf]
  %v153 = vld [vmem:[%s1 + $0xe0] sm:$0xf]
  %v154 = vld [vmem:[%s1 + $0xe4] sm:$0xf]
  %v155 = vld [vmem:[%s1 + $0xe8] sm:$0xf]
  %v156 = vld [vmem:[%s1 + $0xec] sm:$0xf]
  %v157 = vld [vmem:[%s1 + $0xf0] sm:$0xf]
  %v158 = vld [vmem:[%s1 + $0xf4] sm:$0xf]
  %v159 = vld [vmem:[%s1 + $0xf8] sm:$0xf]
  %v160 = vld [vmem:[%s1 + $0xfc] sm:$0xf]
  %v161 = vld [vmem:[%s2] sm:$0x1]
  %v163 = vlaneseq
  %v164 = vshrl.u32 %v163, 7
  %v165 = vsub.s32 0, %v164
  %v166 = vrot.slane %v161, %v165
  %v232 = vunpack.c.l.b16 %v33
  %v233 = vunpack.c.h.b16 %v33
  %v234 = vunpack.c.l.b16 %v34
  %v235 = vunpack.c.h.b16 %v34
  %v236 = vunpack.c.l.b16 %v35
  %v237 = vunpack.c.h.b16 %v35
  %v238 = vunpack.c.l.b16 %v36
  %v239 = vunpack.c.h.b16 %v36
  %v240 = vunpack.c.l.b16 %v37
  %v241 = vunpack.c.h.b16 %v37
  %v242 = vunpack.c.l.b16 %v38
  %v243 = vunpack.c.h.b16 %v38
  %v244 = vunpack.c.l.b16 %v39
  %v245 = vunpack.c.h.b16 %v39
  %v246 = vunpack.c.l.b16 %v40
  %v247 = vunpack.c.h.b16 %v40
  %v248 = vunpack.c.l.b16 %v41
  %v249 = vunpack.c.h.b16 %v41
  %v250 = vunpack.c.l.b16 %v42
  %v251 = vunpack.c.h.b16 %v42
  %v252 = vunpack.c.l.b16 %v43
  %v253 = vunpack.c.h.b16 %v43
  %v254 = vunpack.c.l.b16 %v44
  %v255 = vunpack.c.h.b16 %v44
  %v256 = vunpack.c.l.b16 %v45
  %v257 = vunpack.c.h.b16 %v45
  %v258 = vunpack.c.l.b16 %v46
  %v259 = vunpack.c.h.b16 %v46
  %v260 = vunpack.c.l.b16 %v47
  %v261 = vunpack.c.h.b16 %v47
  %v262 = vunpack.c.l.b16 %v48
  %v263 = vunpack.c.h.b16 %v48
  %v264 = vunpack.c.l.b16 %v49
  %v265 = vunpack.c.h.b16 %v49
  %v266 = vunpack.c.l.b16 %v50
  %v267 = vunpack.c.h.b16 %v50
  %v268 = vunpack.c.l.b16 %v51
  %v269 = vunpack.c.h.b16 %v51
  %v270 = vunpack.c.l.b16 %v52
  %v271 = vunpack.c.h.b16 %v52
  %v272 = vunpack.c.l.b16 %v53
  %v273 = vunpack.c.h.b16 %v53
  %v274 = vunpack.c.l.b16 %v54
  %v275 = vunpack.c.h.b16 %v54
  %v276 = vunpack.c.l.b16 %v55
  %v277 = vunpack.c.h.b16 %v55
  %v278 = vunpack.c.l.b16 %v56
  %v279 = vunpack.c.h.b16 %v56
  %v280 = vunpack.c.l.b16 %v57
  %v281 = vunpack.c.h.b16 %v57
  %v282 = vunpack.c.l.b16 %v58
  %v283 = vunpack.c.h.b16 %v58
  %v284 = vunpack.c.l.b16 %v59
  %v285 = vunpack.c.h.b16 %v59
  %v286 = vunpack.c.l.b16 %v60
  %v287 = vunpack.c.h.b16 %v60
  %v288 = vunpack.c.l.b16 %v61
  %v289 = vunpack.c.h.b16 %v61
  %v290 = vunpack.c.l.b16 %v62
  %v291 = vunpack.c.h.b16 %v62
  %v292 = vunpack.c.l.b16 %v63
  %v293 = vunpack.c.h.b16 %v63
  %v294 = vunpack.c.l.b16 %v64
  %v295 = vunpack.c.h.b16 %v64
  %v296 = vunpack.c.l.b16 %v65
  %v297 = vunpack.c.h.b16 %v65
  %v298 = vunpack.c.l.b16 %v66
  %v299 = vunpack.c.h.b16 %v66
  %v300 = vunpack.c.l.b16 %v67
  %v301 = vunpack.c.h.b16 %v67
  %v302 = vunpack.c.l.b16 %v68
  %v303 = vunpack.c.h.b16 %v68
  %v304 = vunpack.c.l.b16 %v69
  %v305 = vunpack.c.h.b16 %v69
  %v306 = vunpack.c.l.b16 %v70
  %v307 = vunpack.c.h.b16 %v70
  %v308 = vunpack.c.l.b16 %v71
  %v309 = vunpack.c.h.b16 %v71
  %v310 = vunpack.c.l.b16 %v72
  %v311 = vunpack.c.h.b16 %v72
  %v312 = vunpack.c.l.b16 %v73
  %v313 = vunpack.c.h.b16 %v73
  %v314 = vunpack.c.l.b16 %v74
  %v315 = vunpack.c.h.b16 %v74
  %v316 = vunpack.c.l.b16 %v75
  %v317 = vunpack.c.h.b16 %v75
  %v318 = vunpack.c.l.b16 %v76
  %v319 = vunpack.c.h.b16 %v76
  %v320 = vunpack.c.l.b16 %v77
  %v321 = vunpack.c.h.b16 %v77
  %v322 = vunpack.c.l.b16 %v78
  %v323 = vunpack.c.h.b16 %v78
  %v324 = vunpack.c.l.b16 %v79
  %v325 = vunpack.c.h.b16 %v79
  %v326 = vunpack.c.l.b16 %v80
  %v327 = vunpack.c.h.b16 %v80
  %v328 = vunpack.c.l.b16 %v81
  %v329 = vunpack.c.h.b16 %v81
  %v330 = vunpack.c.l.b16 %v82
  %v331 = vunpack.c.h.b16 %v82
  %v332 = vunpack.c.l.b16 %v83
  %v333 = vunpack.c.h.b16 %v83
  %v334 = vunpack.c.l.b16 %v84
  %v335 = vunpack.c.h.b16 %v84
  %v336 = vunpack.c.l.b16 %v85
  %v337 = vunpack.c.h.b16 %v85
  %v338 = vunpack.c.l.b16 %v86
  %v339 = vunpack.c.h.b16 %v86
  %v340 = vunpack.c.l.b16 %v87
  %v341 = vunpack.c.h.b16 %v87
  %v342 = vunpack.c.l.b16 %v88
  %v343 = vunpack.c.h.b16 %v88
  %v344 = vunpack.c.l.b16 %v89
  %v345 = vunpack.c.h.b16 %v89
  %v346 = vunpack.c.l.b16 %v90
  %v347 = vunpack.c.h.b16 %v90
  %v348 = vunpack.c.l.b16 %v91
  %v349 = vunpack.c.h.b16 %v91
  %v350 = vunpack.c.l.b16 %v92
  %v351 = vunpack.c.h.b16 %v92
  %v352 = vunpack.c.l.b16 %v93
  %v353 = vunpack.c.h.b16 %v93
  %v354 = vunpack.c.l.b16 %v94
  %v355 = vunpack.c.h.b16 %v94
  %v356 = vunpack.c.l.b16 %v95
  %v357 = vunpack.c.h.b16 %v95
  %v358 = vunpack.c.l.b16 %v96
  %v359 = vunpack.c.h.b16 %v96
  %v360 = vpack.c.b16 %v236, %v232
  %v361 = vpack.c.b16 %v237, %v233
  %v362 = vpack.c.b16 %v238, %v234
  %v363 = vpack.c.b16 %v239, %v235
  %v364 = vpack.c.b16 %v244, %v240
  %v365 = vpack.c.b16 %v245, %v241
  %v366 = vpack.c.b16 %v246, %v242
  %v367 = vpack.c.b16 %v247, %v243
  %v368 = vpack.c.b16 %v252, %v248
  %v369 = vpack.c.b16 %v253, %v249
  %v370 = vpack.c.b16 %v254, %v250
  %v371 = vpack.c.b16 %v255, %v251
  %v372 = vpack.c.b16 %v260, %v256
  %v373 = vpack.c.b16 %v261, %v257
  %v374 = vpack.c.b16 %v262, %v258
  %v375 = vpack.c.b16 %v263, %v259
  %v376 = vpack.c.b16 %v268, %v264
  %v377 = vpack.c.b16 %v269, %v265
  %v378 = vpack.c.b16 %v270, %v266
  %v379 = vpack.c.b16 %v271, %v267
  %v380 = vpack.c.b16 %v276, %v272
  %v381 = vpack.c.b16 %v277, %v273
  %v382 = vpack.c.b16 %v278, %v274
  %v383 = vpack.c.b16 %v279, %v275
  %v384 = vpack.c.b16 %v284, %v280
  %v385 = vpack.c.b16 %v285, %v281
  %v386 = vpack.c.b16 %v286, %v282
  %v387 = vpack.c.b16 %v287, %v283
  %v388 = vpack.c.b16 %v292, %v288
  %v389 = vpack.c.b16 %v293, %v289
  %v390 = vpack.c.b16 %v294, %v290
  %v391 = vpack.c.b16 %v295, %v291
  %v392 = vpack.c.b16 %v300, %v296
  %v393 = vpack.c.b16 %v301, %v297
  %v394 = vpack.c.b16 %v302, %v298
  %v395 = vpack.c.b16 %v303, %v299
  %v396 = vpack.c.b16 %v308, %v304
  %v397 = vpack.c.b16 %v309, %v305
  %v398 = vpack.c.b16 %v310, %v306
  %v399 = vpack.c.b16 %v311, %v307
  %v400 = vpack.c.b16 %v316, %v312
  %v401 = vpack.c.b16 %v317, %v313
  %v402 = vpack.c.b16 %v318, %v314
  %v403 = vpack.c.b16 %v319, %v315
  %v404 = vpack.c.b16 %v324, %v320
  %v405 = vpack.c.b16 %v325, %v321
  %v406 = vpack.c.b16 %v326, %v322
  %v407 = vpack.c.b16 %v327, %v323
  %v408 = vpack.c.b16 %v332, %v328
  %v409 = vpack.c.b16 %v333, %v329
  %v410 = vpack.c.b16 %v334, %v330
  %v411 = vpack.c.b16 %v335, %v331
  %v412 = vpack.c.b16 %v340, %v336
  %v413 = vpack.c.b16 %v341, %v337
  %v414 = vpack.c.b16 %v342, %v338
  %v415 = vpack.c.b16 %v343, %v339
  %v416 = vpack.c.b16 %v348, %v344
  %v417 = vpack.c.b16 %v349, %v345
  %v418 = vpack.c.b16 %v350, %v346
  %v419 = vpack.c.b16 %v351, %v347
  %v420 = vpack.c.b16 %v356, %v352
  %v421 = vpack.c.b16 %v357, %v353
  %v422 = vpack.c.b16 %v358, %v354
  %v423 = vpack.c.b16 %v359, %v355
  %v552 = vunpack.c.l.b16 %v97
  %v553 = vunpack.c.l.b16 %v98
  %v554 = vunpack.c.l.b16 %v99
  %v555 = vunpack.c.l.b16 %v100
  %v556 = vunpack.c.l.b16 %v101
  %v557 = vunpack.c.l.b16 %v102
  %v558 = vunpack.c.l.b16 %v103
  %v559 = vunpack.c.l.b16 %v104
  %v560 = vunpack.c.l.b16 %v105
  %v561 = vunpack.c.l.b16 %v106
  %v562 = vunpack.c.l.b16 %v107
  %v563 = vunpack.c.l.b16 %v108
  %v564 = vunpack.c.l.b16 %v109
  %v565 = vunpack.c.l.b16 %v110
  %v566 = vunpack.c.l.b16 %v111
  %v567 = vunpack.c.l.b16 %v112
  %v568 = vunpack.c.l.b16 %v113
  %v569 = vunpack.c.l.b16 %v114
  %v570 = vunpack.c.l.b16 %v115
  %v571 = vunpack.c.l.b16 %v116
  %v572 = vunpack.c.l.b16 %v117
  %v573 = vunpack.c.l.b16 %v118
  %v574 = vunpack.c.l.b16 %v119
  %v575 = vunpack.c.l.b16 %v120
  %v576 = vunpack.c.l.b16 %v121
  %v577 = vunpack.c.l.b16 %v122
  %v578 = vunpack.c.l.b16 %v123
  %v579 = vunpack.c.l.b16 %v124
  %v580 = vunpack.c.l.b16 %v125
  %v581 = vunpack.c.l.b16 %v126
  %v582 = vunpack.c.l.b16 %v127
  %v583 = vunpack.c.l.b16 %v128
  %v584 = vunpack.c.l.b16 %v129
  %v585 = vunpack.c.l.b16 %v130
  %v586 = vunpack.c.l.b16 %v131
  %v587 = vunpack.c.l.b16 %v132
  %v588 = vunpack.c.l.b16 %v133
  %v589 = vunpack.c.l.b16 %v134
  %v590 = vunpack.c.l.b16 %v135
  %v591 = vunpack.c.l.b16 %v136
  %v592 = vunpack.c.l.b16 %v137
  %v593 = vunpack.c.l.b16 %v138
  %v594 = vunpack.c.l.b16 %v139
  %v595 = vunpack.c.l.b16 %v140
  %v596 = vunpack.c.l.b16 %v141
  %v597 = vunpack.c.l.b16 %v142
  %v598 = vunpack.c.l.b16 %v143
  %v599 = vunpack.c.l.b16 %v144
  %v600 = vunpack.c.l.b16 %v145
  %v601 = vunpack.c.l.b16 %v146
  %v602 = vunpack.c.l.b16 %v147
  %v603 = vunpack.c.l.b16 %v148
  %v604 = vunpack.c.l.b16 %v149
  %v605 = vunpack.c.l.b16 %v150
  %v606 = vunpack.c.l.b16 %v151
  %v607 = vunpack.c.l.b16 %v152
  %v608 = vunpack.c.l.b16 %v153
  %v609 = vunpack.c.l.b16 %v154
  %v610 = vunpack.c.l.b16 %v155
  %v611 = vunpack.c.l.b16 %v156
  %v612 = vunpack.c.l.b16 %v157
  %v613 = vunpack.c.l.b16 %v158
  %v614 = vunpack.c.l.b16 %v159
  %v615 = vunpack.c.l.b16 %v160
  %v616 = vpack.c.b16 %v553, %v552
  %v617 = vpack.c.b16 %v555, %v554
  %v618 = vpack.c.b16 %v557, %v556
  %v619 = vpack.c.b16 %v559, %v558
  %v620 = vpack.c.b16 %v561, %v560
  %v621 = vpack.c.b16 %v563, %v562
  %v622 = vpack.c.b16 %v565, %v564
  %v623 = vpack.c.b16 %v567, %v566
  %v624 = vpack.c.b16 %v569, %v568
  %v625 = vpack.c.b16 %v571, %v570
  %v626 = vpack.c.b16 %v573, %v572
  %v627 = vpack.c.b16 %v575, %v574
  %v628 = vpack.c.b16 %v577, %v576
  %v629 = vpack.c.b16 %v579, %v578
  %v630 = vpack.c.b16 %v581, %v580
  %v631 = vpack.c.b16 %v583, %v582
  %v632 = vpack.c.b16 %v585, %v584
  %v633 = vpack.c.b16 %v587, %v586
  %v634 = vpack.c.b16 %v589, %v588
  %v635 = vpack.c.b16 %v591, %v590
  %v636 = vpack.c.b16 %v593, %v592
  %v637 = vpack.c.b16 %v595, %v594
  %v638 = vpack.c.b16 %v597, %v596
  %v639 = vpack.c.b16 %v599, %v598
  %v640 = vpack.c.b16 %v601, %v600
  %v641 = vpack.c.b16 %v603, %v602
  %v642 = vpack.c.b16 %v605, %v604
  %v643 = vpack.c.b16 %v607, %v606
  %v644 = vpack.c.b16 %v609, %v608
  %v645 = vpack.c.b16 %v611, %v610
  %v646 = vpack.c.b16 %v613, %v612
  %v647 = vpack.c.b16 %v615, %v614
  %680 = vmatprep.subr.bf16.mxu0 0
  %681 = vmatpush1.bf16.msra.mxu0 %v616
  %682 = vmatprep.subr.bf16.mxu0 0
  %683 = vmatpush1.bf16.msra.mxu0 %v617
  %684 = vmatprep.subr.bf16.mxu0 0
  %685 = vmatpush1.bf16.msra.mxu0 %v618
  %686 = vmatprep.subr.bf16.mxu0 0
  %687 = vmatpush1.bf16.msra.mxu0 %v619
  %688 = vmatprep.subr.bf16.mxu0 0
  %689 = vmatpush1.bf16.msra.mxu0 %v620
  %690 = vmatprep.subr.bf16.mxu0 0
  %691 = vmatpush1.bf16.msra.mxu0 %v621
  %692 = vmatprep.subr.bf16.mxu0 0
  %693 = vmatpush1.bf16.msra.mxu0 %v622
  %694 = vmatprep.subr.bf16.mxu0 0
  %695 = vmatpush1.bf16.msra.mxu0 %v623
  %696 = vmatprep.subr.bf16.mxu0 0
  %697 = vmatpush1.bf16.msra.mxu0 %v624
  %698 = vmatprep.subr.bf16.mxu0 0
  %699 = vmatpush1.bf16.msra.mxu0 %v625
  %700 = vmatprep.subr.bf16.mxu0 0
  %701 = vmatpush1.bf16.msra.mxu0 %v626
  %702 = vmatprep.subr.bf16.mxu0 0
  %703 = vmatpush1.bf16.msra.mxu0 %v627
  %704 = vmatprep.subr.bf16.mxu0 0
  %705 = vmatpush1.bf16.msra.mxu0 %v628
  %706 = vmatprep.subr.bf16.mxu0 0
  %707 = vmatpush1.bf16.msra.mxu0 %v629
  %708 = vmatprep.subr.bf16.mxu0 0
  %709 = vmatpush1.bf16.msra.mxu0 %v630
  %710 = vmatprep.subr.bf16.mxu0 0
  %711 = vmatpush1.bf16.msra.mxu0 %v631
  %712 = vmatprep.mubr.bf16.mxu0 %v361
  %713 = vmatmul.mubr.bf16.gmra.mrb[0].mxu0 %v360
  %v714 = vpop.f32.mrb[0].mxu0
  %v715 = vadd.f32 %v166, %v714
  %v716 = vpop.f32.mrb[0].mxu0
  %v717 = vpop.f32.mrb[0].mxu0
  %v718 = vadd.f32 %v166, %v717
  %v719 = vpop.f32.mrb[0].mxu0
  %720 = vmatprep.mubr.bf16.mxu0 %v365
  %721 = vmatmul.mubr.bf16.gmra.mrb[0].mxu0 %v364
  %v722 = vpop.f32.mrb[0].mxu0
  %v723 = vadd.f32 %v166, %v722
  %v724 = vpop.f32.mrb[0].mxu0
  %v725 = vpop.f32.mrb[0].mxu0
  %v726 = vadd.f32 %v166, %v725
  %v727 = vpop.f32.mrb[0].mxu0
  %728 = vmatprep.mubr.bf16.mxu0 %v369
  %729 = vmatmul.mubr.bf16.gmra.mrb[0].mxu0 %v368
  %v730 = vpop.f32.mrb[0].mxu0
  %v731 = vadd.f32 %v166, %v730
  %v732 = vpop.f32.mrb[0].mxu0
  %v733 = vpop.f32.mrb[0].mxu0
  %v734 = vadd.f32 %v166, %v733
  %v735 = vpop.f32.mrb[0].mxu0
  %736 = vmatprep.mubr.bf16.mxu0 %v373
  %737 = vmatmul.mubr.bf16.gmra.mrb[0].mxu0 %v372
  %v738 = vpop.f32.mrb[0].mxu0
  %v739 = vadd.f32 %v166, %v738
  %v740 = vpop.f32.mrb[0].mxu0
  %v741 = vpop.f32.mrb[0].mxu0
  %v742 = vadd.f32 %v166, %v741
  %v743 = vpop.f32.mrb[0].mxu0
  %744 = vmatprep.mubr.bf16.mxu0 %v377
  %745 = vmatmul.mubr.bf16.gmra.mrb[0].mxu0 %v376
  %v746 = vpop.f32.mrb[0].mxu0
  %v747 = vadd.f32 %v166, %v746
  %v748 = vpop.f32.mrb[0].mxu0
  %v749 = vpop.f32.mrb[0].mxu0
  %v750 = vadd.f32 %v166, %v749
  %v751 = vpop.f32.mrb[0].mxu0
  %752 = vmatprep.mubr.bf16.mxu0 %v381
  %753 = vmatmul.mubr.bf16.gmra.mrb[0].mxu0 %v380
  %v754 = vpop.f32.mrb[0].mxu0
  %v755 = vadd.f32 %v166, %v754
  %v756 = vpop.f32.mrb[0].mxu0
  %v757 = vpop.f32.mrb[0].mxu0
  %v758 = vadd.f32 %v166, %v757
  %v759 = vpop.f32.mrb[0].mxu0
  %760 = vmatprep.mubr.bf16.mxu0 %v385
  %761 = vmatmul.mubr.bf16.gmra.mrb[0].mxu0 %v384
  %v762 = vpop.f32.mrb[0].mxu0
  %v763 = vadd.f32 %v166, %v762
  %v764 = vpop.f32.mrb[0].mxu0
  %v765 = vpop.f32.mrb[0].mxu0
  %v766 = vadd.f32 %v166, %v765
  %v767 = vpop.f32.mrb[0].mxu0
  %768 = vmatprep.mubr.bf16.mxu0 %v389
  %769 = vmatmul.mubr.bf16.gmra.mrb[0].mxu0 %v388
  %v770 = vpop.f32.mrb[0].mxu0
  %v771 = vadd.f32 %v166, %v770
  %v772 = vpop.f32.mrb[0].mxu0
  %v773 = vpop.f32.mrb[0].mxu0
  %v774 = vadd.f32 %v166, %v773
  %v775 = vpop.f32.mrb[0].mxu0
  %776 = vmatprep.mubr.bf16.mxu0 %v393
  %777 = vmatmul.mubr.bf16.gmra.mrb[0].mxu0 %v392
  %v778 = vpop.f32.mrb[0].mxu0
  %v779 = vadd.f32 %v166, %v778
  %v780 = vpop.f32.mrb[0].mxu0
  %v781 = vpop.f32.mrb[0].mxu0
  %v782 = vadd.f32 %v166, %v781
  %v783 = vpop.f32.mrb[0].mxu0
  %784 = vmatprep.mubr.bf16.mxu0 %v397
  %785 = vmatmul.mubr.bf16.gmra.mrb[0].mxu0 %v396
  %v786 = vpop.f32.mrb[0].mxu0
  %v787 = vadd.f32 %v166, %v786
  %v788 = vpop.f32.mrb[0].mxu0
  %v789 = vpop.f32.mrb[0].mxu0
  %v790 = vadd.f32 %v166, %v789
  %v791 = vpop.f32.mrb[0].mxu0
  %792 = vmatprep.mubr.bf16.mxu0 %v401
  %793 = vmatmul.mubr.bf16.gmra.mrb[0].mxu0 %v400
  %v794 = vpop.f32.mrb[0].mxu0
  %v795 = vadd.f32 %v166, %v794
  %v796 = vpop.f32.mrb[0].mxu0
  %v797 = vpop.f32.mrb[0].mxu0
  %v798 = vadd.f32 %v166, %v797
  %v799 = vpop.f32.mrb[0].mxu0
  %800 = vmatprep.mubr.bf16.mxu0 %v405
  %801 = vmatmul.mubr.bf16.gmra.mrb[0].mxu0 %v404
  %v802 = vpop.f32.mrb[0].mxu0
  %v803 = vadd.f32 %v166, %v802
  %v804 = vpop.f32.mrb[0].mxu0
  %v805 = vpop.f32.mrb[0].mxu0
  %v806 = vadd.f32 %v166, %v805
  %v807 = vpop.f32.mrb[0].mxu0
  %808 = vmatprep.mubr.bf16.mxu0 %v409
  %809 = vmatmul.mubr.bf16.gmra.mrb[0].mxu0 %v408
  %v810 = vpop.f32.mrb[0].mxu0
  %v811 = vadd.f32 %v166, %v810
  %v812 = vpop.f32.mrb[0].mxu0
  %v813 = vpop.f32.mrb[0].mxu0
  %v814 = vadd.f32 %v166, %v813
  %v815 = vpop.f32.mrb[0].mxu0
  %816 = vmatprep.mubr.bf16.mxu0 %v413
  %817 = vmatmul.mubr.bf16.gmra.mrb[0].mxu0 %v412
  %v818 = vpop.f32.mrb[0].mxu0
  %v819 = vadd.f32 %v166, %v818
  %v820 = vpop.f32.mrb[0].mxu0
  %v821 = vpop.f32.mrb[0].mxu0
  %v822 = vadd.f32 %v166, %v821
  %v823 = vpop.f32.mrb[0].mxu0
  %824 = vmatprep.mubr.bf16.mxu0 %v417
  %825 = vmatmul.mubr.bf16.gmra.mrb[0].mxu0 %v416
  %v826 = vpop.f32.mrb[0].mxu0
  %v827 = vadd.f32 %v166, %v826
  %v828 = vpop.f32.mrb[0].mxu0
  %v829 = vpop.f32.mrb[0].mxu0
  %v830 = vadd.f32 %v166, %v829
  %v831 = vpop.f32.mrb[0].mxu0
  %832 = vmatprep.mubr.bf16.mxu0 %v421
  %833 = vmatmul.mubr.bf16.gmra.mrb[0].mxu0 %v420
  %v834 = vpop.f32.mrb[0].mxu0
  %v835 = vadd.f32 %v166, %v834
  %v836 = vpop.f32.mrb[0].mxu0
  %v837 = vpop.f32.mrb[0].mxu0
  %v838 = vadd.f32 %v166, %v837
  %v839 = vpop.f32.mrb[0].mxu0
  %840 = vdwg.mxu0
  %841 = vmatprep.subr.bf16.mxu0 0
  %842 = vmatpush1.bf16.msra.mxu0 %v632
  %843 = vmatprep.subr.bf16.mxu0 0
  %844 = vmatpush1.bf16.msra.mxu0 %v633
  %845 = vmatprep.subr.bf16.mxu0 0
  %846 = vmatpush1.bf16.msra.mxu0 %v634
  %847 = vmatprep.subr.bf16.mxu0 0
  %848 = vmatpush1.bf16.msra.mxu0 %v635
  %849 = vmatprep.subr.bf16.mxu0 0
  %850 = vmatpush1.bf16.msra.mxu0 %v636
  %851 = vmatprep.subr.bf16.mxu0 0
  %852 = vmatpush1.bf16.msra.mxu0 %v637
  %853 = vmatprep.subr.bf16.mxu0 0
  %854 = vmatpush1.bf16.msra.mxu0 %v638
  %855 = vmatprep.subr.bf16.mxu0 0
  %856 = vmatpush1.bf16.msra.mxu0 %v639
  %857 = vmatprep.subr.bf16.mxu0 0
  %858 = vmatpush1.bf16.msra.mxu0 %v640
  %859 = vmatprep.subr.bf16.mxu0 0
  %860 = vmatpush1.bf16.msra.mxu0 %v641
  %861 = vmatprep.subr.bf16.mxu0 0
  %862 = vmatpush1.bf16.msra.mxu0 %v642
  %863 = vmatprep.subr.bf16.mxu0 0
  %864 = vmatpush1.bf16.msra.mxu0 %v643
  %865 = vmatprep.subr.bf16.mxu0 0
  %866 = vmatpush1.bf16.msra.mxu0 %v644
  %867 = vmatprep.subr.bf16.mxu0 0
  %868 = vmatpush1.bf16.msra.mxu0 %v645
  %869 = vmatprep.subr.bf16.mxu0 0
  %870 = vmatpush1.bf16.msra.mxu0 %v646
  %871 = vmatprep.subr.bf16.mxu0 0
  %872 = vmatpush1.bf16.msra.mxu0 %v647
  %873 = vmatprep.mubr.bf16.mxu0 %v363
  %874 = vmatmul.mubr.bf16.gmra.mrb[0].mxu0 %v362
  %v875 = vpop.f32.mrb[0].mxu0
  %v876 = vadd.f32 %v715, %v875
  %v877 = vpop.f32.mrb[0].mxu0
  %v878 = vpop.f32.mrb[0].mxu0
  %v879 = vadd.f32 %v718, %v878
  %v880 = vpop.f32.mrb[0].mxu0
  %881 = vmatprep.mubr.bf16.mxu0 %v367
  %882 = vmatmul.mubr.bf16.gmra.mrb[0].mxu0 %v366
  %v883 = vpop.f32.mrb[0].mxu0
  %v884 = vadd.f32 %v723, %v883
  %v885 = vpop.f32.mrb[0].mxu0
  %v886 = vpop.f32.mrb[0].mxu0
  %v887 = vadd.f32 %v726, %v886
  %v888 = vpop.f32.mrb[0].mxu0
  %889 = vmatprep.mubr.bf16.mxu0 %v371
  %890 = vmatmul.mubr.bf16.gmra.mrb[0].mxu0 %v370
  %v891 = vpop.f32.mrb[0].mxu0
  %v892 = vadd.f32 %v731, %v891
  %v893 = vpop.f32.mrb[0].mxu0
  %v894 = vpop.f32.mrb[0].mxu0
  %v895 = vadd.f32 %v734, %v894
  %v896 = vpop.f32.mrb[0].mxu0
  %897 = vmatprep.mubr.bf16.mxu0 %v375
  %898 = vmatmul.mubr.bf16.gmra.mrb[0].mxu0 %v374
  %v899 = vpop.f32.mrb[0].mxu0
  %v900 = vadd.f32 %v739, %v899
  %v901 = vpop.f32.mrb[0].mxu0
  %v902 = vpop.f32.mrb[0].mxu0
  %v903 = vadd.f32 %v742, %v902
  %v904 = vpop.f32.mrb[0].mxu0
  %905 = vmatprep.mubr.bf16.mxu0 %v379
  %906 = vmatmul.mubr.bf16.gmra.mrb[0].mxu0 %v378
  %v907 = vpop.f32.mrb[0].mxu0
  %v908 = vadd.f32 %v747, %v907
  %v909 = vpop.f32.mrb[0].mxu0
  %v910 = vpop.f32.mrb[0].mxu0
  %v911 = vadd.f32 %v750, %v910
  %v912 = vpop.f32.mrb[0].mxu0
  %913 = vmatprep.mubr.bf16.mxu0 %v383
  %914 = vmatmul.mubr.bf16.gmra.mrb[0].mxu0 %v382
  %v915 = vpop.f32.mrb[0].mxu0
  %v916 = vadd.f32 %v755, %v915
  %v917 = vpop.f32.mrb[0].mxu0
  %v918 = vpop.f32.mrb[0].mxu0
  %v919 = vadd.f32 %v758, %v918
  %v920 = vpop.f32.mrb[0].mxu0
  %921 = vmatprep.mubr.bf16.mxu0 %v387
  %922 = vmatmul.mubr.bf16.gmra.mrb[0].mxu0 %v386
  %v923 = vpop.f32.mrb[0].mxu0
  %v924 = vadd.f32 %v763, %v923
  %v925 = vpop.f32.mrb[0].mxu0
  %v926 = vpop.f32.mrb[0].mxu0
  %v927 = vadd.f32 %v766, %v926
  %v928 = vpop.f32.mrb[0].mxu0
  %929 = vmatprep.mubr.bf16.mxu0 %v391
  %930 = vmatmul.mubr.bf16.gmra.mrb[0].mxu0 %v390
  %v931 = vpop.f32.mrb[0].mxu0
  %v932 = vadd.f32 %v771, %v931
  %v933 = vpop.f32.mrb[0].mxu0
  %v934 = vpop.f32.mrb[0].mxu0
  %v935 = vadd.f32 %v774, %v934
  %v936 = vpop.f32.mrb[0].mxu0
  %937 = vmatprep.mubr.bf16.mxu0 %v395
  %938 = vmatmul.mubr.bf16.gmra.mrb[0].mxu0 %v394
  %v939 = vpop.f32.mrb[0].mxu0
  %v940 = vadd.f32 %v779, %v939
  %v941 = vpop.f32.mrb[0].mxu0
  %v942 = vpop.f32.mrb[0].mxu0
  %v943 = vadd.f32 %v782, %v942
  %v944 = vpop.f32.mrb[0].mxu0
  %945 = vmatprep.mubr.bf16.mxu0 %v399
  %946 = vmatmul.mubr.bf16.gmra.mrb[0].mxu0 %v398
  %v947 = vpop.f32.mrb[0].mxu0
  %v948 = vadd.f32 %v787, %v947
  %v949 = vpop.f32.mrb[0].mxu0
  %v950 = vpop.f32.mrb[0].mxu0
  %v951 = vadd.f32 %v790, %v950
  %v952 = vpop.f32.mrb[0].mxu0
  %953 = vmatprep.mubr.bf16.mxu0 %v403
  %954 = vmatmul.mubr.bf16.gmra.mrb[0].mxu0 %v402
  %v955 = vpop.f32.mrb[0].mxu0
  %v956 = vadd.f32 %v795, %v955
  %v957 = vpop.f32.mrb[0].mxu0
  %v958 = vpop.f32.mrb[0].mxu0
  %v959 = vadd.f32 %v798, %v958
  %v960 = vpop.f32.mrb[0].mxu0
  %961 = vmatprep.mubr.bf16.mxu0 %v407
  %962 = vmatmul.mubr.bf16.gmra.mrb[0].mxu0 %v406
  %v963 = vpop.f32.mrb[0].mxu0
  %v964 = vadd.f32 %v803, %v963
  %v965 = vpop.f32.mrb[0].mxu0
  %v966 = vpop.f32.mrb[0].mxu0
  %v967 = vadd.f32 %v806, %v966
  %v968 = vpop.f32.mrb[0].mxu0
  %969 = vmatprep.mubr.bf16.mxu0 %v411
  %970 = vmatmul.mubr.bf16.gmra.mrb[0].mxu0 %v410
  %v971 = vpop.f32.mrb[0].mxu0
  %v972 = vadd.f32 %v811, %v971
  %v973 = vpop.f32.mrb[0].mxu0
  %v974 = vpop.f32.mrb[0].mxu0
  %v975 = vadd.f32 %v814, %v974
  %v976 = vpop.f32.mrb[0].mxu0
  %977 = vmatprep.mubr.bf16.mxu0 %v415
  %978 = vmatmul.mubr.bf16.gmra.mrb[0].mxu0 %v414
  %v979 = vpop.f32.mrb[0].mxu0
  %v980 = vadd.f32 %v819, %v979
  %v981 = vpop.f32.mrb[0].mxu0
  %v982 = vpop.f32.mrb[0].mxu0
  %v983 = vadd.f32 %v822, %v982
  %v984 = vpop.f32.mrb[0].mxu0
  %985 = vmatprep.mubr.bf16.mxu0 %v419
  %986 = vmatmul.mubr.bf16.gmra.mrb[0].mxu0 %v418
  %v987 = vpop.f32.mrb[0].mxu0
  %v988 = vadd.f32 %v827, %v987
  %v989 = vpop.f32.mrb[0].mxu0
  %v990 = vpop.f32.mrb[0].mxu0
  %v991 = vadd.f32 %v830, %v990
  %v992 = vpop.f32.mrb[0].mxu0
  %993 = vmatprep.mubr.bf16.mxu0 %v423
  %994 = vmatmul.mubr.bf16.gmra.mrb[0].mxu0 %v422
  %v995 = vpop.f32.mrb[0].mxu0
  %v996 = vadd.f32 %v835, %v995
  %v997 = vpop.f32.mrb[0].mxu0
  %v998 = vpop.f32.mrb[0].mxu0
  %v999 = vadd.f32 %v838, %v998
  %v1000 = vpop.f32.mrb[0].mxu0
  %1001 = vdwg.mxu0
  %v1002 = vmax.f32 %v876, 0.0
  %v1003 = vmax.f32 %v879, 0.0
  %v1004 = vmax.f32 %v884, 0.0
  %v1005 = vmax.f32 %v887, 0.0
  %v1006 = vmax.f32 %v892, 0.0
  %v1007 = vmax.f32 %v895, 0.0
  %v1008 = vmax.f32 %v900, 0.0
  %v1009 = vmax.f32 %v903, 0.0
  %v1010 = vmax.f32 %v908, 0.0
  %v1011 = vmax.f32 %v911, 0.0
  %v1012 = vmax.f32 %v916, 0.0
  %v1013 = vmax.f32 %v919, 0.0
  %v1014 = vmax.f32 %v924, 0.0
  %v1015 = vmax.f32 %v927, 0.0
  %v1016 = vmax.f32 %v932, 0.0
  %v1017 = vmax.f32 %v935, 0.0
  %v1018 = vmax.f32 %v940, 0.0
  %v1019 = vmax.f32 %v943, 0.0
  %v1020 = vmax.f32 %v948, 0.0
  %v1021 = vmax.f32 %v951, 0.0
  %v1022 = vmax.f32 %v956, 0.0
  %v1023 = vmax.f32 %v959, 0.0
  %v1024 = vmax.f32 %v964, 0.0
  %v1025 = vmax.f32 %v967, 0.0
  %v1026 = vmax.f32 %v972, 0.0
  %v1027 = vmax.f32 %v975, 0.0
  %v1028 = vmax.f32 %v980, 0.0
  %v1029 = vmax.f32 %v983, 0.0
  %v1030 = vmax.f32 %v988, 0.0
  %v1031 = vmax.f32 %v991, 0.0
  %v1032 = vmax.f32 %v996, 0.0
  %v1033 = vmax.f32 %v999, 0.0
  %v1034 = vpack.c.bf16 %v1003, %v1002
  %v1035 = vpack.c.bf16 %v1005, %v1004
  %v1036 = vpack.c.bf16 %v1007, %v1006
  %v1037 = vpack.c.bf16 %v1009, %v1008
  %v1038 = vpack.c.bf16 %v1011, %v1010
  %v1039 = vpack.c.bf16 %v1013, %v1012
  %v1040 = vpack.c.bf16 %v1015, %v1014
  %v1041 = vpack.c.bf16 %v1017, %v1016
  %v1042 = vpack.c.bf16 %v1019, %v1018
  %v1043 = vpack.c.bf16 %v1021, %v1020
  %v1044 = vpack.c.bf16 %v1023, %v1022
  %v1045 = vpack.c.bf16 %v1025, %v1024
  %v1046 = vpack.c.bf16 %v1027, %v1026
  %v1047 = vpack.c.bf16 %v1029, %v1028
  %v1048 = vpack.c.bf16 %v1031, %v1030
  %v1049 = vpack.c.bf16 %v1033, %v1032
  %v1050 = vld [vmem:[%s3] sm:$0xf]
  %v1051 = vld [vmem:[%s3 + $0x4] sm:$0xf]
  %v1052 = vld [vmem:[%s3 + $0x8] sm:$0xf]
  %v1053 = vld [vmem:[%s3 + $0xc] sm:$0xf]
  %v1054 = vld [vmem:[%s3 + $0x10] sm:$0xf]
  %v1055 = vld [vmem:[%s3 + $0x14] sm:$0xf]
  %v1056 = vld [vmem:[%s3 + $0x18] sm:$0xf]
  %v1057 = vld [vmem:[%s3 + $0x1c] sm:$0xf]
  %v1058 = vld [vmem:[%s3 + $0x20] sm:$0xf]
  %v1059 = vld [vmem:[%s3 + $0x24] sm:$0xf]
  %v1060 = vld [vmem:[%s3 + $0x28] sm:$0xf]
  %v1061 = vld [vmem:[%s3 + $0x2c] sm:$0xf]
  %v1062 = vld [vmem:[%s3 + $0x30] sm:$0xf]
  %v1063 = vld [vmem:[%s3 + $0x34] sm:$0xf]
  %v1064 = vld [vmem:[%s3 + $0x38] sm:$0xf]
  %v1065 = vld [vmem:[%s3 + $0x3c] sm:$0xf]
  %v1066 = vld [vmem:[%s4] sm:$0x1]
  %v1068 = vlaneseq
  %v1069 = vshrl.u32 %v1068, 7
  %v1070 = vsub.s32 0, %v1069
  %v1071 = vrot.slane %v1066, %v1070
  %v1089 = vunpack.c.l.b16 %v1050
  %v1090 = vunpack.c.l.b16 %v1051
  %v1091 = vunpack.c.l.b16 %v1052
  %v1092 = vunpack.c.l.b16 %v1053
  %v1093 = vunpack.c.l.b16 %v1054
  %v1094 = vunpack.c.l.b16 %v1055
  %v1095 = vunpack.c.l.b16 %v1056
  %v1096 = vunpack.c.l.b16 %v1057
  %v1097 = vunpack.c.l.b16 %v1058
  %v1098 = vunpack.c.l.b16 %v1059
  %v1099 = vunpack.c.l.b16 %v1060
  %v1100 = vunpack.c.l.b16 %v1061
  %v1101 = vunpack.c.l.b16 %v1062
  %v1102 = vunpack.c.l.b16 %v1063
  %v1103 = vunpack.c.l.b16 %v1064
  %v1104 = vunpack.c.l.b16 %v1065
  %v1105 = vpack.c.b16 %v1090, %v1089
  %v1106 = vpack.c.b16 %v1092, %v1091
  %v1107 = vpack.c.b16 %v1094, %v1093
  %v1108 = vpack.c.b16 %v1096, %v1095
  %v1109 = vpack.c.b16 %v1098, %v1097
  %v1110 = vpack.c.b16 %v1100, %v1099
  %v1111 = vpack.c.b16 %v1102, %v1101
  %v1112 = vpack.c.b16 %v1104, %v1103
  %1121 = vmatprep.subr.bf16.mxu0 0
  %1122 = vmatpush1.bf16.msra.mxu0 %v1105
  %1123 = vmatprep.subr.bf16.mxu0 0
  %1124 = vmatpush1.bf16.msra.mxu0 %v1106
  %1125 = vmatprep.subr.bf16.mxu0 0
  %1126 = vmatpush1.bf16.msra.mxu0 %v1107
  %1127 = vmatprep.subr.bf16.mxu0 0
  %1128 = vmatpush1.bf16.msra.mxu0 %v1108
  %1129 = vmatprep.subr.bf16.mxu0 0
  %1130 = vmatpush1.bf16.msra.mxu0 %v1109
  %1131 = vmatprep.subr.bf16.mxu0 0
  %1132 = vmatpush1.bf16.msra.mxu0 %v1110
  %1133 = vmatprep.subr.bf16.mxu0 0
  %1134 = vmatpush1.bf16.msra.mxu0 %v1111
  %1135 = vmatprep.subr.bf16.mxu0 0
  %1136 = vmatpush1.bf16.msra.mxu0 %v1112
  %1137 = vmatprep.subr.bf16.mxu0 0
  %1138 = vmatpush1.bf16.msra.mxu0 0
  %1139 = vmatprep.subr.bf16.mxu0 0
  %1140 = vmatpush1.bf16.msra.mxu0 0
  %1141 = vmatprep.subr.bf16.mxu0 0
  %1142 = vmatpush1.bf16.msra.mxu0 0
  %1143 = vmatprep.subr.bf16.mxu0 0
  %1144 = vmatpush1.bf16.msra.mxu0 0
  %1145 = vmatprep.subr.bf16.mxu0 0
  %1146 = vmatpush1.bf16.msra.mxu0 0
  %1147 = vmatprep.subr.bf16.mxu0 0
  %1148 = vmatpush1.bf16.msra.mxu0 0
  %1149 = vmatprep.subr.bf16.mxu0 0
  %1150 = vmatpush1.bf16.msra.mxu0 0
  %1151 = vmatprep.subr.bf16.mxu0 0
  %1152 = vmatpush1.bf16.msra.mxu0 0
  %1153 = vmatprep.mubr.bf16.mxu0 0
  %1154 = vmatmul.mubr.bf16.gmra.mrb[0].mxu0 %v1034
  %v1155 = vpop.f32.mrb[0].mxu0
  %v1156 = vadd.f32 %v1071, %v1155
  %v1157 = vpop.f32.mrb[0].mxu0
  %v1158 = vpop.f32.mrb[0].mxu0
  %v1159 = vadd.f32 %v1071, %v1158
  %v1160 = vpop.f32.mrb[0].mxu0
  %1161 = vmatprep.mubr.bf16.mxu0 0
  %1162 = vmatmul.mubr.bf16.gmra.mrb[0].mxu0 %v1035
  %v1163 = vpop.f32.mrb[0].mxu0
  %v1164 = vadd.f32 %v1071, %v1163
  %v1165 = vpop.f32.mrb[0].mxu0
  %v1166 = vpop.f32.mrb[0].mxu0
  %v1167 = vadd.f32 %v1071, %v1166
  %v1168 = vpop.f32.mrb[0].mxu0
  %1169 = vmatprep.mubr.bf16.mxu0 0
  %1170 = vmatmul.mubr.bf16.gmra.mrb[0].mxu0 %v1036
  %v1171 = vpop.f32.mrb[0].mxu0
  %v1172 = vadd.f32 %v1071, %v1171
  %v1173 = vpop.f32.mrb[0].mxu0
  %v1174 = vpop.f32.mrb[0].mxu0
  %v1175 = vadd.f32 %v1071, %v1174
  %v1176 = vpop.f32.mrb[0].mxu0
  %1177 = vmatprep.mubr.bf16.mxu0 0
  %1178 = vmatmul.mubr.bf16.gmra.mrb[0].mxu0 %v1037
  %v1179 = vpop.f32.mrb[0].mxu0
  %v1180 = vadd.f32 %v1071, %v1179
  %v1181 = vpop.f32.mrb[0].mxu0
  %v1182 = vpop.f32.mrb[0].mxu0
  %v1183 = vadd.f32 %v1071, %v1182
  %v1184 = vpop.f32.mrb[0].mxu0
  %1185 = vmatprep.mubr.bf16.mxu0 0
  %1186 = vmatmul.mubr.bf16.gmra.mrb[0].mxu0 %v1038
  %v1187 = vpop.f32.mrb[0].mxu0
  %v1188 = vadd.f32 %v1071, %v1187
  %v1189 = vpop.f32.mrb[0].mxu0
  %v1190 = vpop.f32.mrb[0].mxu0
  %v1191 = vadd.f32 %v1071, %v1190
  %v1192 = vpop.f32.mrb[0].mxu0
  %1193 = vmatprep.mubr.bf16.mxu0 0
  %1194 = vmatmul.mubr.bf16.gmra.mrb[0].mxu0 %v1039
  %v1195 = vpop.f32.mrb[0].mxu0
  %v1196 = vadd.f32 %v1071, %v1195
  %v1197 = vpop.f32.mrb[0].mxu0
  %v1198 = vpop.f32.mrb[0].mxu0
  %v1199 = vadd.f32 %v1071, %v1198
  %v1200 = vpop.f32.mrb[0].mxu0
  %1201 = vmatprep.mubr.bf16.mxu0 0
  %1202 = vmatmul.mubr.bf16.gmra.mrb[0].mxu0 %v1040
  %v1203 = vpop.f32.mrb[0].mxu0
  %v1204 = vadd.f32 %v1071, %v1203
  %v1205 = vpop.f32.mrb[0].mxu0
  %v1206 = vpop.f32.mrb[0].mxu0
  %v1207 = vadd.f32 %v1071, %v1206
  %v1208 = vpop.f32.mrb[0].mxu0
  %1209 = vmatprep.mubr.bf16.mxu0 0
  %1210 = vmatmul.mubr.bf16.gmra.mrb[0].mxu0 %v1041
  %v1211 = vpop.f32.mrb[0].mxu0
  %v1212 = vadd.f32 %v1071, %v1211
  %v1213 = vpop.f32.mrb[0].mxu0
  %v1214 = vpop.f32.mrb[0].mxu0
  %v1215 = vadd.f32 %v1071, %v1214
  %v1216 = vpop.f32.mrb[0].mxu0
  %1217 = vmatprep.mubr.bf16.mxu0 0
  %1218 = vmatmul.mubr.bf16.gmra.mrb[0].mxu0 %v1042
  %v1219 = vpop.f32.mrb[0].mxu0
  %v1220 = vadd.f32 %v1071, %v1219
  %v1221 = vpop.f32.mrb[0].mxu0
  %v1222 = vpop.f32.mrb[0].mxu0
  %v1223 = vadd.f32 %v1071, %v1222
  %v1224 = vpop.f32.mrb[0].mxu0
  %1225 = vmatprep.mubr.bf16.mxu0 0
  %1226 = vmatmul.mubr.bf16.gmra.mrb[0].mxu0 %v1043
  %v1227 = vpop.f32.mrb[0].mxu0
  %v1228 = vadd.f32 %v1071, %v1227
  %v1229 = vpop.f32.mrb[0].mxu0
  %v1230 = vpop.f32.mrb[0].mxu0
  %v1231 = vadd.f32 %v1071, %v1230
  %v1232 = vpop.f32.mrb[0].mxu0
  %1233 = vmatprep.mubr.bf16.mxu0 0
  %1234 = vmatmul.mubr.bf16.gmra.mrb[0].mxu0 %v1044
  %v1235 = vpop.f32.mrb[0].mxu0
  %v1236 = vadd.f32 %v1071, %v1235
  %v1237 = vpop.f32.mrb[0].mxu0
  %v1238 = vpop.f32.mrb[0].mxu0
  %v1239 = vadd.f32 %v1071, %v1238
  %v1240 = vpop.f32.mrb[0].mxu0
  %1241 = vmatprep.mubr.bf16.mxu0 0
  %1242 = vmatmul.mubr.bf16.gmra.mrb[0].mxu0 %v1045
  %v1243 = vpop.f32.mrb[0].mxu0
  %v1244 = vadd.f32 %v1071, %v1243
  %v1245 = vpop.f32.mrb[0].mxu0
  %v1246 = vpop.f32.mrb[0].mxu0
  %v1247 = vadd.f32 %v1071, %v1246
  %v1248 = vpop.f32.mrb[0].mxu0
  %1249 = vmatprep.mubr.bf16.mxu0 0
  %1250 = vmatmul.mubr.bf16.gmra.mrb[0].mxu0 %v1046
  %v1251 = vpop.f32.mrb[0].mxu0
  %v1252 = vadd.f32 %v1071, %v1251
  %v1253 = vpop.f32.mrb[0].mxu0
  %v1254 = vpop.f32.mrb[0].mxu0
  %v1255 = vadd.f32 %v1071, %v1254
  %v1256 = vpop.f32.mrb[0].mxu0
  %1257 = vmatprep.mubr.bf16.mxu0 0
  %1258 = vmatmul.mubr.bf16.gmra.mrb[0].mxu0 %v1047
  %v1259 = vpop.f32.mrb[0].mxu0
  %v1260 = vadd.f32 %v1071, %v1259
  %v1261 = vpop.f32.mrb[0].mxu0
  %v1262 = vpop.f32.mrb[0].mxu0
  %v1263 = vadd.f32 %v1071, %v1262
  %v1264 = vpop.f32.mrb[0].mxu0
  %1265 = vmatprep.mubr.bf16.mxu0 0
  %1266 = vmatmul.mubr.bf16.gmra.mrb[0].mxu0 %v1048
  %v1267 = vpop.f32.mrb[0].mxu0
  %v1268 = vadd.f32 %v1071, %v1267
  %v1269 = vpop.f32.mrb[0].mxu0
  %v1270 = vpop.f32.mrb[0].mxu0
  %v1271 = vadd.f32 %v1071, %v1270
  %v1272 = vpop.f32.mrb[0].mxu0
  %1273 = vmatprep.mubr.bf16.mxu0 0
  %1274 = vmatmul.mubr.bf16.gmra.mrb[0].mxu0 %v1049
  %v1275 = vpop.f32.mrb[0].mxu0
  %v1276 = vadd.f32 %v1071, %v1275
  %v1277 = vpop.f32.mrb[0].mxu0
  %v1278 = vpop.f32.mrb[0].mxu0
  %v1279 = vadd.f32 %v1071, %v1278
  %v1280 = vpop.f32.mrb[0].mxu0
  %1281 = vdwg.mxu0
  %v1282 = vtanh.pop %v1156
  %v1283 = vtanh.pop %v1159
  %v1284 = vtanh.pop %v1164
  %v1285 = vtanh.pop %v1167
  %v1286 = vtanh.pop %v1172
  %v1287 = vtanh.pop %v1175
  %v1288 = vtanh.pop %v1180
  %v1289 = vtanh.pop %v1183
  %v1290 = vtanh.pop %v1188
  %v1291 = vtanh.pop %v1191
  %v1292 = vtanh.pop %v1196
  %v1293 = vtanh.pop %v1199
  %v1294 = vtanh.pop %v1204
  %v1295 = vtanh.pop %v1207
  %v1296 = vtanh.pop %v1212
  %v1297 = vtanh.pop %v1215
  %v1298 = vtanh.pop %v1220
  %v1299 = vtanh.pop %v1223
  %v1300 = vtanh.pop %v1228
  %v1301 = vtanh.pop %v1231
  %v1302 = vtanh.pop %v1236
  %v1303 = vtanh.pop %v1239
  %v1304 = vtanh.pop %v1244
  %v1305 = vtanh.pop %v1247
  %v1306 = vtanh.pop %v1252
  %v1307 = vtanh.pop %v1255
  %v1308 = vtanh.pop %v1260
  %v1309 = vtanh.pop %v1263
  %v1310 = vtanh.pop %v1268
  %v1311 = vtanh.pop %v1271
  %v1312 = vtanh.pop %v1276
  %v1313 = vtanh.pop %v1279
  %v1314 = vpack.c.bf16 %v1283, %v1282
  %v1315 = vpack.c.bf16 %v1285, %v1284
  %v1316 = vpack.c.bf16 %v1287, %v1286
  %v1317 = vpack.c.bf16 %v1289, %v1288
  %v1318 = vpack.c.bf16 %v1291, %v1290
  %v1319 = vpack.c.bf16 %v1293, %v1292
  %v1320 = vpack.c.bf16 %v1295, %v1294
  %v1321 = vpack.c.bf16 %v1297, %v1296
  %v1322 = vpack.c.bf16 %v1299, %v1298
  %v1323 = vpack.c.bf16 %v1301, %v1300
  %v1324 = vpack.c.bf16 %v1303, %v1302
  %v1325 = vpack.c.bf16 %v1305, %v1304
  %v1326 = vpack.c.bf16 %v1307, %v1306
  %v1327 = vpack.c.bf16 %v1309, %v1308
  %v1328 = vpack.c.bf16 %v1311, %v1310
  %v1329 = vpack.c.bf16 %v1313, %v1312
  %v1330 = vld [vmem:[%s5] sm:$0xf]
  %v1331 = vld [vmem:[%s5 + $0x4] sm:$0xf]
  %v1332 = vld [vmem:[%s5 + $0x8] sm:$0xf]
  %v1333 = vld [vmem:[%s5 + $0xc] sm:$0xf]
  %v1334 = vld [vmem:[%s5 + $0x10] sm:$0xf]
  %v1335 = vld [vmem:[%s5 + $0x14] sm:$0xf]
  %v1336 = vld [vmem:[%s5 + $0x18] sm:$0xf]
  %v1337 = vld [vmem:[%s5 + $0x1c] sm:$0xf]
  %v1338 = vld [vmem:[%s5 + $0x20] sm:$0xf]
  %v1339 = vld [vmem:[%s5 + $0x24] sm:$0xf]
  %v1340 = vld [vmem:[%s5 + $0x28] sm:$0xf]
  %v1341 = vld [vmem:[%s5 + $0x2c] sm:$0xf]
  %v1342 = vld [vmem:[%s5 + $0x30] sm:$0xf]
  %v1343 = vld [vmem:[%s5 + $0x34] sm:$0xf]
  %v1344 = vld [vmem:[%s5 + $0x38] sm:$0xf]
  %v1345 = vld [vmem:[%s5 + $0x3c] sm:$0xf]
  %v1346 = vld [vmem:[%s6] sm:$0x1]
  %v1348 = vlaneseq
  %v1349 = vshrl.u32 %v1348, 7
  %v1350 = vsub.s32 0, %v1349
  %v1351 = vrot.slane %v1346, %v1350
  %v1369 = vunpack.c.l.b16 %v1330
  %v1370 = vunpack.c.l.b16 %v1331
  %v1371 = vunpack.c.l.b16 %v1332
  %v1372 = vunpack.c.l.b16 %v1333
  %v1373 = vunpack.c.l.b16 %v1334
  %v1374 = vunpack.c.l.b16 %v1335
  %v1375 = vunpack.c.l.b16 %v1336
  %v1376 = vunpack.c.l.b16 %v1337
  %v1377 = vunpack.c.l.b16 %v1338
  %v1378 = vunpack.c.l.b16 %v1339
  %v1379 = vunpack.c.l.b16 %v1340
  %v1380 = vunpack.c.l.b16 %v1341
  %v1381 = vunpack.c.l.b16 %v1342
  %v1382 = vunpack.c.l.b16 %v1343
  %v1383 = vunpack.c.l.b16 %v1344
  %v1384 = vunpack.c.l.b16 %v1345
  %v1385 = vpack.c.b16 %v1370, %v1369
  %v1386 = vpack.c.b16 %v1372, %v1371
  %v1387 = vpack.c.b16 %v1374, %v1373
  %v1388 = vpack.c.b16 %v1376, %v1375
  %v1389 = vpack.c.b16 %v1378, %v1377
  %v1390 = vpack.c.b16 %v1380, %v1379
  %v1391 = vpack.c.b16 %v1382, %v1381
  %v1392 = vpack.c.b16 %v1384, %v1383
  %1401 = vmatprep.subr.bf16.mxu0 0
  %1402 = vmatpush1.bf16.msra.mxu0 %v1385
  %1403 = vmatprep.subr.bf16.mxu0 0
  %1404 = vmatpush1.bf16.msra.mxu0 %v1386
  %1405 = vmatprep.subr.bf16.mxu0 0
  %1406 = vmatpush1.bf16.msra.mxu0 %v1387
  %1407 = vmatprep.subr.bf16.mxu0 0
  %1408 = vmatpush1.bf16.msra.mxu0 %v1388
  %1409 = vmatprep.subr.bf16.mxu0 0
  %1410 = vmatpush1.bf16.msra.mxu0 %v1389
  %1411 = vmatprep.subr.bf16.mxu0 0
  %1412 = vmatpush1.bf16.msra.mxu0 %v1390
  %1413 = vmatprep.subr.bf16.mxu0 0
  %1414 = vmatpush1.bf16.msra.mxu0 %v1391
  %1415 = vmatprep.subr.bf16.mxu0 0
  %1416 = vmatpush1.bf16.msra.mxu0 %v1392
  %1417 = vmatprep.subr.bf16.mxu0 0
  %1418 = vmatpush1.bf16.msra.mxu0 0
  %1419 = vmatprep.subr.bf16.mxu0 0
  %1420 = vmatpush1.bf16.msra.mxu0 0
  %1421 = vmatprep.subr.bf16.mxu0 0
  %1422 = vmatpush1.bf16.msra.mxu0 0
  %1423 = vmatprep.subr.bf16.mxu0 0
  %1424 = vmatpush1.bf16.msra.mxu0 0
  %1425 = vmatprep.subr.bf16.mxu0 0
  %1426 = vmatpush1.bf16.msra.mxu0 0
  %1427 = vmatprep.subr.bf16.mxu0 0
  %1428 = vmatpush1.bf16.msra.mxu0 0
  %1429 = vmatprep.subr.bf16.mxu0 0
  %1430 = vmatpush1.bf16.msra.mxu0 0
  %1431 = vmatprep.subr.bf16.mxu0 0
  %1432 = vmatpush1.bf16.msra.mxu0 0
  %1433 = vmatprep.mubr.bf16.mxu0 0
  %1434 = vmatmul.mubr.bf16.gmra.mrb[0].mxu0 %v1314
  %v1435 = vpop.f32.mrb[0].mxu0
  %v1436 = vadd.f32 %v1351, %v1435
  %v1437 = vpop.f32.mrb[0].mxu0
  %v1438 = vpop.f32.mrb[0].mxu0
  %v1439 = vadd.f32 %v1351, %v1438
  %v1440 = vpop.f32.mrb[0].mxu0
  %1441 = vmatprep.mubr.bf16.mxu0 0
  %1442 = vmatmul.mubr.bf16.gmra.mrb[0].mxu0 %v1315
  %v1443 = vpop.f32.mrb[0].mxu0
  %v1444 = vadd.f32 %v1351, %v1443
  %v1445 = vpop.f32.mrb[0].mxu0
  %v1446 = vpop.f32.mrb[0].mxu0
  %v1447 = vadd.f32 %v1351, %v1446
  %v1448 = vpop.f32.mrb[0].mxu0
  %1449 = vmatprep.mubr.bf16.mxu0 0
  %1450 = vmatmul.mubr.bf16.gmra.mrb[0].mxu0 %v1316
  %v1451 = vpop.f32.mrb[0].mxu0
  %v1452 = vadd.f32 %v1351, %v1451
  %v1453 = vpop.f32.mrb[0].mxu0
  %v1454 = vpop.f32.mrb[0].mxu0
  %v1455 = vadd.f32 %v1351, %v1454
  %v1456 = vpop.f32.mrb[0].mxu0
  %1457 = vmatprep.mubr.bf16.mxu0 0
  %1458 = vmatmul.mubr.bf16.gmra.mrb[0].mxu0 %v1317
  %v1459 = vpop.f32.mrb[0].mxu0
  %v1460 = vadd.f32 %v1351, %v1459
  %v1461 = vpop.f32.mrb[0].mxu0
  %v1462 = vpop.f32.mrb[0].mxu0
  %v1463 = vadd.f32 %v1351, %v1462
  %v1464 = vpop.f32.mrb[0].mxu0
  %1465 = vmatprep.mubr.bf16.mxu0 0
  %1466 = vmatmul.mubr.bf16.gmra.mrb[0].mxu0 %v1318
  %v1467 = vpop.f32.mrb[0].mxu0
  %v1468 = vadd.f32 %v1351, %v1467
  %v1469 = vpop.f32.mrb[0].mxu0
  %v1470 = vpop.f32.mrb[0].mxu0
  %v1471 = vadd.f32 %v1351, %v1470
  %v1472 = vpop.f32.mrb[0].mxu0
  %1473 = vmatprep.mubr.bf16.mxu0 0
  %1474 = vmatmul.mubr.bf16.gmra.mrb[0].mxu0 %v1319
  %v1475 = vpop.f32.mrb[0].mxu0
  %v1476 = vadd.f32 %v1351, %v1475
  %v1477 = vpop.f32.mrb[0].mxu0
  %v1478 = vpop.f32.mrb[0].mxu0
  %v1479 = vadd.f32 %v1351, %v1478
  %v1480 = vpop.f32.mrb[0].mxu0
  %1481 = vmatprep.mubr.bf16.mxu0 0
  %1482 = vmatmul.mubr.bf16.gmra.mrb[0].mxu0 %v1320
  %v1483 = vpop.f32.mrb[0].mxu0
  %v1484 = vadd.f32 %v1351, %v1483
  %v1485 = vpop.f32.mrb[0].mxu0
  %v1486 = vpop.f32.mrb[0].mxu0
  %v1487 = vadd.f32 %v1351, %v1486
  %v1488 = vpop.f32.mrb[0].mxu0
  %1489 = vmatprep.mubr.bf16.mxu0 0
  %1490 = vmatmul.mubr.bf16.gmra.mrb[0].mxu0 %v1321
  %v1491 = vpop.f32.mrb[0].mxu0
  %v1492 = vadd.f32 %v1351, %v1491
  %v1493 = vpop.f32.mrb[0].mxu0
  %v1494 = vpop.f32.mrb[0].mxu0
  %v1495 = vadd.f32 %v1351, %v1494
  %v1496 = vpop.f32.mrb[0].mxu0
  %1497 = vmatprep.mubr.bf16.mxu0 0
  %1498 = vmatmul.mubr.bf16.gmra.mrb[0].mxu0 %v1322
  %v1499 = vpop.f32.mrb[0].mxu0
  %v1500 = vadd.f32 %v1351, %v1499
  %v1501 = vpop.f32.mrb[0].mxu0
  %v1502 = vpop.f32.mrb[0].mxu0
  %v1503 = vadd.f32 %v1351, %v1502
  %v1504 = vpop.f32.mrb[0].mxu0
  %1505 = vmatprep.mubr.bf16.mxu0 0
  %1506 = vmatmul.mubr.bf16.gmra.mrb[0].mxu0 %v1323
  %v1507 = vpop.f32.mrb[0].mxu0
  %v1508 = vadd.f32 %v1351, %v1507
  %v1509 = vpop.f32.mrb[0].mxu0
  %v1510 = vpop.f32.mrb[0].mxu0
  %v1511 = vadd.f32 %v1351, %v1510
  %v1512 = vpop.f32.mrb[0].mxu0
  %1513 = vmatprep.mubr.bf16.mxu0 0
  %1514 = vmatmul.mubr.bf16.gmra.mrb[0].mxu0 %v1324
  %v1515 = vpop.f32.mrb[0].mxu0
  %v1516 = vadd.f32 %v1351, %v1515
  %v1517 = vpop.f32.mrb[0].mxu0
  %v1518 = vpop.f32.mrb[0].mxu0
  %v1519 = vadd.f32 %v1351, %v1518
  %v1520 = vpop.f32.mrb[0].mxu0
  %1521 = vmatprep.mubr.bf16.mxu0 0
  %1522 = vmatmul.mubr.bf16.gmra.mrb[0].mxu0 %v1325
  %v1523 = vpop.f32.mrb[0].mxu0
  %v1524 = vadd.f32 %v1351, %v1523
  %v1525 = vpop.f32.mrb[0].mxu0
  %v1526 = vpop.f32.mrb[0].mxu0
  %v1527 = vadd.f32 %v1351, %v1526
  %v1528 = vpop.f32.mrb[0].mxu0
  %1529 = vmatprep.mubr.bf16.mxu0 0
  %1530 = vmatmul.mubr.bf16.gmra.mrb[0].mxu0 %v1326
  %v1531 = vpop.f32.mrb[0].mxu0
  %v1532 = vadd.f32 %v1351, %v1531
  %v1533 = vpop.f32.mrb[0].mxu0
  %v1534 = vpop.f32.mrb[0].mxu0
  %v1535 = vadd.f32 %v1351, %v1534
  %v1536 = vpop.f32.mrb[0].mxu0
  %1537 = vmatprep.mubr.bf16.mxu0 0
  %1538 = vmatmul.mubr.bf16.gmra.mrb[0].mxu0 %v1327
  %v1539 = vpop.f32.mrb[0].mxu0
  %v1540 = vadd.f32 %v1351, %v1539
  %v1541 = vpop.f32.mrb[0].mxu0
  %v1542 = vpop.f32.mrb[0].mxu0
  %v1543 = vadd.f32 %v1351, %v1542
  %v1544 = vpop.f32.mrb[0].mxu0
  %1545 = vmatprep.mubr.bf16.mxu0 0
  %1546 = vmatmul.mubr.bf16.gmra.mrb[0].mxu0 %v1328
  %v1547 = vpop.f32.mrb[0].mxu0
  %v1548 = vadd.f32 %v1351, %v1547
  %v1549 = vpop.f32.mrb[0].mxu0
  %v1550 = vpop.f32.mrb[0].mxu0
  %v1551 = vadd.f32 %v1351, %v1550
  %v1552 = vpop.f32.mrb[0].mxu0
  %1553 = vmatprep.mubr.bf16.mxu0 0
  %1554 = vmatmul.mubr.bf16.gmra.mrb[0].mxu0 %v1329
  %v1555 = vpop.f32.mrb[0].mxu0
  %v1556 = vadd.f32 %v1351, %v1555
  %v1557 = vpop.f32.mrb[0].mxu0
  %v1558 = vpop.f32.mrb[0].mxu0
  %v1559 = vadd.f32 %v1351, %v1558
  %v1560 = vpop.f32.mrb[0].mxu0
  %1561 = vdwg.mxu0
  %v1562 = vmax.f32 %v1436, 0.0
  %v1563 = vmax.f32 %v1439, 0.0
  %v1564 = vmax.f32 %v1444, 0.0
  %v1565 = vmax.f32 %v1447, 0.0
  %v1566 = vmax.f32 %v1452, 0.0
  %v1567 = vmax.f32 %v1455, 0.0
  %v1568 = vmax.f32 %v1460, 0.0
  %v1569 = vmax.f32 %v1463, 0.0
  %v1570 = vmax.f32 %v1468, 0.0
  %v1571 = vmax.f32 %v1471, 0.0
  %v1572 = vmax.f32 %v1476, 0.0
  %v1573 = vmax.f32 %v1479, 0.0
  %v1574 = vmax.f32 %v1484, 0.0
  %v1575 = vmax.f32 %v1487, 0.0
  %v1576 = vmax.f32 %v1492, 0.0
  %v1577 = vmax.f32 %v1495, 0.0
  %v1578 = vmax.f32 %v1500, 0.0
  %v1579 = vmax.f32 %v1503, 0.0
  %v1580 = vmax.f32 %v1508, 0.0
  %v1581 = vmax.f32 %v1511, 0.0
  %v1582 = vmax.f32 %v1516, 0.0
  %v1583 = vmax.f32 %v1519, 0.0
  %v1584 = vmax.f32 %v1524, 0.0
  %v1585 = vmax.f32 %v1527, 0.0
  %v1586 = vmax.f32 %v1532, 0.0
  %v1587 = vmax.f32 %v1535, 0.0
  %v1588 = vmax.f32 %v1540, 0.0
  %v1589 = vmax.f32 %v1543, 0.0
  %v1590 = vmax.f32 %v1548, 0.0
  %v1591 = vmax.f32 %v1551, 0.0
  %v1592 = vmax.f32 %v1556, 0.0
  %v1593 = vmax.f32 %v1559, 0.0
  %v1594 = vpack.c.bf16 %v1563, %v1562
  %v1595 = vpack.c.bf16 %v1565, %v1564
  %v1596 = vpack.c.bf16 %v1567, %v1566
  %v1597 = vpack.c.bf16 %v1569, %v1568
  %v1598 = vpack.c.bf16 %v1571, %v1570
  %v1599 = vpack.c.bf16 %v1573, %v1572
  %v1600 = vpack.c.bf16 %v1575, %v1574
  %v1601 = vpack.c.bf16 %v1577, %v1576
  %v1602 = vpack.c.bf16 %v1579, %v1578
  %v1603 = vpack.c.bf16 %v1581, %v1580
  %v1604 = vpack.c.bf16 %v1583, %v1582
  %v1605 = vpack.c.bf16 %v1585, %v1584
  %v1606 = vpack.c.bf16 %v1587, %v1586
  %v1607 = vpack.c.bf16 %v1589, %v1588
  %v1608 = vpack.c.bf16 %v1591, %v1590
  %v1609 = vpack.c.bf16 %v1593, %v1592
  %v1610 = vld [vmem:[%s7] sm:$0xf]
  %v1611 = vld [vmem:[%s8] sm:$0xff]
  %1613 = vset.pattern.permute.xlu0 0
  %1614 = vperm.xlu0 %1613, %v1611
  %v1615 = vpop.permute.xlu0 %1614
  %1617 = vmatprep.subr.bf16.mxu0 0
  %1618 = vmatpush1.bf16.xpose.msra.mxu0 %v1594
  %1619 = vmatprep.subr.bf16.mxu0 0
  %1620 = vmatpush1.bf16.xpose.msra.mxu0 %v1595
  %1621 = vmatprep.subr.bf16.mxu0 0
  %1622 = vmatpush1.bf16.xpose.msra.mxu0 %v1596
  %1623 = vmatprep.subr.bf16.mxu0 0
  %1624 = vmatpush1.bf16.xpose.msra.mxu0 %v1597
  %1625 = vmatprep.subr.bf16.mxu0 0
  %1626 = vmatpush1.bf16.xpose.msra.mxu0 %v1598
  %1627 = vmatprep.subr.bf16.mxu0 0
  %1628 = vmatpush1.bf16.xpose.msra.mxu0 %v1599
  %1629 = vmatprep.subr.bf16.mxu0 0
  %1630 = vmatpush1.bf16.xpose.msra.mxu0 %v1600
  %1631 = vmatprep.subr.bf16.mxu0 0
  %1632 = vmatpush1.bf16.xpose.msra.mxu0 %v1601
  %1633 = vmatprep.subr.bf16.mxu0 0
  %1634 = vmatpush1.bf16.xpose.msra.mxu0 %v1602
  %1635 = vmatprep.subr.bf16.mxu0 0
  %1636 = vmatpush1.bf16.xpose.msra.mxu0 %v1603
  %1637 = vmatprep.subr.bf16.mxu0 0
  %1638 = vmatpush1.bf16.xpose.msra.mxu0 %v1604
  %1639 = vmatprep.subr.bf16.mxu0 0
  %1640 = vmatpush1.bf16.xpose.msra.mxu0 %v1605
  %1641 = vmatprep.subr.bf16.mxu0 0
  %1642 = vmatpush1.bf16.xpose.msra.mxu0 %v1606
  %1643 = vmatprep.subr.bf16.mxu0 0
  %1644 = vmatpush1.bf16.xpose.msra.mxu0 %v1607
  %1645 = vmatprep.subr.bf16.mxu0 0
  %1646 = vmatpush1.bf16.xpose.msra.mxu0 %v1608
  %1647 = vmatprep.subr.bf16.mxu0 0
  %1648 = vmatpush1.bf16.xpose.msra.mxu0 %v1609
  %1649 = vmatprep.mubr.bf16.mxu0 0
  %1650 = vmatmul.mubr.bf16.gmra.mrb[0].mxu0 %v1610
  %v1651 = vpop.f32.mrb[0].mxu0
  %v1652 = vadd.f32 %v1615, %v1651
  %v1653 = vpop.f32.mrb[0].mxu0
  %v1654 = vadd.f32 %v1615, %v1653
  %v1655 = vpop.f32.mrb[0].mxu0
  %v1656 = vpop.f32.mrb[0].mxu0
  %1657 = vdwg.mxu0
  %v1658 = vxor.u32 %v1652, 2147483648
  %v1659 = vxor.u32 %v1654, 2147483648
  %v1660 = vmul.f32 %v1658, 1.442695
  %v1661 = vpow.pop %v1660
  %v1662 = vmul.f32 %v1659, 1.442695
  %v1663 = vpow.pop %v1662
  %v1664 = vadd.f32 %v1661, 1.0
  %v1665 = vadd.f32 %v1663, 1.0
  %v1666 = vrcp.pop %v1664
  %v1667 = vmul.f32 1.0, %v1666
  %v1668 = vrcp.pop %v1665
  %v1669 = vmul.f32 1.0, %v1668
  %1670 = vst [vmem:[%s9] sm:$0xff] %v1667
  %1671 = vst [vmem:[%s9 + $0x8] sm:$0xff] %v1669
  // Predicated region
  $region38: #{net_forward.1} parent=0 // pred_check
    _
  $region39: #{net_forward.1} parent=0 // pred_check_branch
    %1673 = sbr.rel (0) target = $region41
  $region40: #{net_forward.1} parent=0 // pred_region
    _
  $region41: #{net_forward.1} parent=0 // pred_fallthru
    _
  // Predicated region
  $region42: #{net_forward.1} parent=0 // pred_check
    _
  $region43: #{net_forward.1} parent=0 // pred_check_branch
    %1675 = sbr.rel (0) target = $region45
  $region44: #{net_forward.1} parent=0 // pred_region
    _
  $region45: #{net_forward.1} parent=0 // pred_fallthru
    _

</llo_original>
